<compile_context>
chip_gen: v5e
topology: v5e:2x2
jax: 0.10.0
libtpu: 0.0.40
codegen_flags: <defaults>
</compile_context>

<pallas_src>
import functools

import jax
import jax.numpy as jnp
import numpy as np
from jax import lax
from jax.experimental import pallas as pl
from jax.experimental.pallas import tpu as pltpu

BN_EPS = 1e-5
LANE = 128      # channel dims are padded to a multiple of the TPU lane width
_COL0 = 8       # sublane-aligned column offset of the halo-scratch interior


def _round_up(n, m):
    return ((n + m - 1) // m) * m


# ----------------------------------------------------------------------------
# Pallas kernels
# ----------------------------------------------------------------------------
def _depthwise3x3(pad_ref, t_hw, wd, H, W, Ho, Wo, stride):
    """3x3 depthwise conv (zero pad 1, given stride) of a flat (H*W, C) f32
    activation via the (H+2, W+16, C) VMEM halo scratch.  Returns (Ho*Wo, C)."""
    C = t_hw.shape[-1]

    # Zero only the 1-px halo border that the taps read (not the whole scratch).
    # Doing it per step (instead of once under pl.when(program_id==0)) keeps it
    # correct even when the "parallel" batch axis is sharded across TensorCores.
    zrow = jnp.zeros(pad_ref.shape[1:], jnp.float32)
    pad_ref[0] = zrow
    pad_ref[H + 1] = zrow
    zcol = jnp.zeros((H, 1, C), jnp.float32)
    pad_ref[pl.ds(1, H), pl.ds(_COL0 - 1, 1), :] = zcol
    pad_ref[pl.ds(1, H), pl.ds(_COL0 + W, 1), :] = zcol

    # Interior store at a sublane-aligned column offset (multiple of 8).
    pad_ref[pl.ds(1, H), pl.ds(_COL0, W), :] = t_hw.reshape(H, W, C)

    acc = jnp.zeros((Ho, Wo, C), jnp.float32)
    for dy in range(3):
        for dx in range(3):
            c0 = _COL0 - 1 + dx
            if stride == 1:
                win = pad_ref[pl.ds(dy, Ho), pl.ds(c0, Wo), :]
            else:
                # TODO(synk): stride>1 uses strided window reads; an even/odd
                # phase split would avoid sublane-strided loads.
                win = pad_ref[pl.ds(dy, Ho, stride=stride),
                              pl.ds(c0, Wo, stride=stride), :]
            acc = acc + win * wd[dy, dx]
    return acc.reshape(Ho * Wo, C)


def _branch2_body(H, W, stride, x2d, w1_ref, s1_ref, b1_ref, wd_ref,
                  s2_ref, b2_ref, w2_ref, s3_ref, b3_ref, pad_ref):
    """branch2: 1x1 conv+BN+ReLU -> 3x3 dw conv (pad 1)+BN -> 1x1 conv+BN+ReLU."""
    Ho = (H - 1) // stride + 1
    Wo = (W - 1) // stride + 1
    # pointwise conv #1: MXU matmul (bf16 operands, f32 accumulation) + BN + ReLU
    t = jnp.dot(x2d, w1_ref[...], preferred_element_type=jnp.float32)
    t = jnp.maximum(t * s1_ref[...] + b1_ref[...], 0.0)
    # 3x3 depthwise conv (f32, VPU) + folded BN (no ReLU)
    d = _depthwise3x3(pad_ref, t, wd_ref[...], H, W, Ho, Wo, stride)
    d = d * s2_ref[...] + b2_ref[...]
    # pointwise conv #2: MXU matmul + folded BN + ReLU
    y = jnp.dot(d.astype(w2_ref.dtype), w2_ref[...],
                preferred_element_type=jnp.float32)
    return jnp.maximum(y * s3_ref[...] + b3_ref[...], 0.0)


def _branch2_kernel(H, W, stride, x_ref, w1_ref, s1_ref, b1_ref, wd_ref,
                    s2_ref, b2_ref, w2_ref, s3_ref, b3_ref, o_ref, pad_ref):
    o_ref[0] = _branch2_body(H, W, stride, x_ref[0], w1_ref, s1_ref, b1_ref,
                             wd_ref, s2_ref, b2_ref, w2_ref, s3_ref, b3_ref,
                             pad_ref)


def _fused_downsample_kernel(H, W, stride, x_ref,
                             wd1_ref, s11_ref, b11_ref, w1p_ref, s12_ref, b12_ref,
                             w21_ref, s21_ref, b21_ref, wd2_ref, s22_ref, b22_ref,
                             w22_ref, s23_ref, b23_ref,
                             y1_ref, y2_ref, pad1_ref, pad2_ref):
    """stride>1 unit: branch1 and branch2 fused so x is read from HBM once."""
    Ho = (H - 1) // stride + 1
    Wo = (W - 1) // stride + 1
    x2d = x_ref[0]

    # branch1: 3x3 dw conv (pad 1, stride s) + BN -> 1x1 conv + BN + ReLU
    d1 = _depthwise3x3(pad1_ref, x2d.astype(jnp.float32), wd1_ref[...],
                       H, W, Ho, Wo, stride)
    d1 = d1 * s11_ref[...] + b11_ref[...]
    z1 = jnp.dot(d1.astype(w1p_ref.dtype), w1p_ref[...],
                 preferred_element_type=jnp.float32)
    y1_ref[0] = jnp.maximum(z1 * s12_ref[...] + b12_ref[...], 0.0)

    # branch2
    y2_ref[0] = _branch2_body(H, W, stride, x2d, w21_ref, s21_ref, b21_ref,
                              wd2_ref, s22_ref, b22_ref, w22_ref, s23_ref,
                              b23_ref, pad2_ref)


# ----------------------------------------------------------------------------
# pallas_call wrappers
# ----------------------------------------------------------------------------
def _compiler_params():
    return pltpu.CompilerParams(dimension_semantics=("parallel",),
                                vmem_limit_bytes=32 * 1024 * 1024)


def _run_branch2(x2, p, H, W, stride):
    """x2: (B, H*W, Cp) bf16 -> (B, Ho*Wo, Fp) f32."""
    B, HW, Cp = x2.shape
    Fp = p["w1"].shape[1]
    Ho = (H - 1) // stride + 1
    Wo = (W - 1) // stride + 1
    vec = lambda b: (0, 0)
    vec3 = lambda b: (0, 0, 0)
    in_specs = [
        pl.BlockSpec((1, HW, Cp), lambda b: (b, 0, 0)),
        pl.BlockSpec((Cp, Fp), vec),
        pl.BlockSpec((1, Fp), vec),
        pl.BlockSpec((1, Fp), vec),
        pl.BlockSpec((3, 3, Fp), vec3),
        pl.BlockSpec((1, Fp), vec),
        pl.BlockSpec((1, Fp), vec),
        pl.BlockSpec((Fp, Fp), vec),
        pl.BlockSpec((1, Fp), vec),
        pl.BlockSpec((1, Fp), vec),
    ]
    out_spec = pl.BlockSpec((1, Ho * Wo, Fp), lambda b: (b, 0, 0))
    return pl.pallas_call(
        functools.partial(_branch2_kernel, H, W, stride),
        out_shape=jax.ShapeDtypeStruct((B, Ho * Wo, Fp), jnp.float32),
        grid_spec=pltpu.PrefetchScalarGridSpec(
            num_scalar_prefetch=0, grid=(B,),
            in_specs=in_specs, out_specs=out_spec,
            scratch_shapes=[pltpu.VMEM((H + 2, W + 16, Fp), jnp.float32)]),
        compiler_params=_compiler_params(),
    )(x2, p["w1"], p["s1"], p["b1"], p["wd"], p["s2"], p["b2"],
      p["w2"], p["s3"], p["b3"])


def _run_fused_downsample(xf, p1, p2, H, W, stride):
    """stride>1: one pallas_call, two outputs (branch1, branch2)."""
    B, HW, Cp = xf.shape
    Fp = p2["w1"].shape[1]
    Ho = (H - 1) // stride + 1
    Wo = (W - 1) // stride + 1
    vec = lambda b: (0, 0)
    vec3 = lambda b: (0, 0, 0)
    in_specs = [
        pl.BlockSpec((1, HW, Cp), lambda b: (b, 0, 0)),
        pl.BlockSpec((3, 3, Cp), vec3),        # branch1 dw weights
        pl.BlockSpec((1, Cp), vec),
        pl.BlockSpec((1, Cp), vec),
        pl.BlockSpec((Cp, Fp), vec),           # branch1 1x1
        pl.BlockSpec((1, Fp), vec),
        pl.BlockSpec((1, Fp), vec),
        pl.BlockSpec((Cp, Fp), vec),           # branch2 1x1 #1
        pl.BlockSpec((1, Fp), vec),
        pl.BlockSpec((1, Fp), vec),
        pl.BlockSpec((3, 3, Fp), vec3),        # branch2 dw weights
        pl.BlockSpec((1, Fp), vec),
        pl.BlockSpec((1, Fp), vec),
        pl.BlockSpec((Fp, Fp), vec),           # branch2 1x1 #2
        pl.BlockSpec((1, Fp), vec),
        pl.BlockSpec((1, Fp), vec),
    ]
    out_specs = (pl.BlockSpec((1, Ho * Wo, Fp), lambda b: (b, 0, 0)),
                 pl.BlockSpec((1, Ho * Wo, Fp), lambda b: (b, 0, 0)))
    out_shape = (jax.ShapeDtypeStruct((B, Ho * Wo, Fp), jnp.float32),
                 jax.ShapeDtypeStruct((B, Ho * Wo, Fp), jnp.float32))
    return pl.pallas_call(
        functools.partial(_fused_downsample_kernel, H, W, stride),
        out_shape=out_shape,
        grid_spec=pltpu.PrefetchScalarGridSpec(
            num_scalar_prefetch=0, grid=(B,),
            in_specs=in_specs, out_specs=out_specs,
            scratch_shapes=[pltpu.VMEM((H + 2, W + 16, Cp), jnp.float32),
                            pltpu.VMEM((H + 2, W + 16, Fp), jnp.float32)]),
        compiler_params=_compiler_params(),
    )(xf, p1["wd"], p1["s1"], p1["b1"], p1["w1"], p1["s2"], p1["b2"],
      p2["w1"], p2["s1"], p2["b1"], p2["wd"], p2["s2"], p2["b2"],
      p2["w2"], p2["s3"], p2["b3"])


# ----------------------------------------------------------------------------
# Parameters (deterministic synthetic init; PyTorch-shaped) + BN folding + padding
# ----------------------------------------------------------------------------
def init_params(key, inp, oup, stride):
    bf = oup // 2
    cin2 = inp if stride > 1 else bf
    keys = jax.random.split(key, 10)

    def conv(k, o, i, kh, kw):
        return 0.1 * jax.random.normal(k, (o, i, kh, kw), jnp.float32)

    def bn(k, c):
        k1, k2, k3, k4 = jax.random.split(k, 4)
        gamma = jax.random.uniform(k1, (c,), jnp.float32, minval=0.5, maxval=1.5)
        beta = 0.1 * jax.random.normal(k2, (c,), jnp.float32)
        mean = 0.1 * jax.random.normal(k3, (c,), jnp.float32)
        var = jax.random.uniform(k4, (c,), jnp.float32, minval=0.5, maxval=1.5)
        return gamma, beta, mean, var

    params = {}
    if stride > 1:
        params["b1_dw_w"] = conv(keys[0], inp, 1, 3, 3)
        params["b1_bn1"] = bn(keys[1], inp)
        params["b1_pw_w"] = conv(keys[2], bf, inp, 1, 1)
        params["b1_bn2"] = bn(keys[3], bf)
    params["b2_pw1_w"] = conv(keys[4], bf, cin2, 1, 1)
    params["b2_bn1"] = bn(keys[5], bf)
    params["b2_dw_w"] = conv(keys[6], bf, 1, 3, 3)
    params["b2_bn2"] = bn(keys[7], bf)
    params["b2_pw2_w"] = conv(keys[8], bf, bf, 1, 1)
    params["b2_bn3"] = bn(keys[9], bf)
    return params


def _fold_bn(bn):
    # eval-mode BatchNorm: y = (x - mean) / sqrt(var + eps) * gamma + beta
    gamma, beta, mean, var = bn
    scale = gamma / jnp.sqrt(var + BN_EPS)
    bias = beta - mean * scale
    return scale.reshape(1, -1), bias.reshape(1, -1)


def _pad_last(a, target):
    pad = target - a.shape[-1]
    if pad == 0:
        return a
    cfg = [(0, 0)] * (a.ndim - 1) + [(0, pad)]
    return jnp.pad(a, cfg)


def _pad_mat(w, rows, cols):
    return jnp.pad(w, ((0, rows - w.shape[0]), (0, cols - w.shape[1])))


def _prep_branch2(params, cin_p, f_p):
    w1 = params["b2_pw1_w"][:, :, 0, 0].T                         # (cin, bf)
    s1, b1 = _fold_bn(params["b2_bn1"])
    wd = jnp.transpose(params["b2_dw_w"][:, 0, :, :], (1, 2, 0))  # (3, 3, bf)
    s2, b2 = _fold_bn(params["b2_bn2"])
    w2 = params["b2_pw2_w"][:, :, 0, 0].T                         # (bf, bf)
    s3, b3 = _fold_bn(params["b2_bn3"])
    return dict(
        w1=_pad_mat(w1, cin_p, f_p).astype(jnp.bfloat16),
        s1=_pad_last(s1, f_p), b1=_pad_last(b1, f_p),
        wd=_pad_last(wd, f_p),
        s2=_pad_last(s2, f_p), b2=_pad_last(b2, f_p),
        w2=_pad_mat(w2, f_p, f_p).astype(jnp.bfloat16),
        s3=_pad_last(s3, f_p), b3=_pad_last(b3, f_p))


def _prep_branch1(params, cin_p, f_p):
    wd = jnp.transpose(params["b1_dw_w"][:, 0, :, :], (1, 2, 0))  # (3, 3, inp)
    s1, b1 = _fold_bn(params["b1_bn1"])
    w1 = params["b1_pw_w"][:, :, 0, 0].T                          # (inp, bf)
    s2, b2 = _fold_bn(params["b1_bn2"])
    return dict(
        wd=_pad_last(wd, cin_p),
        s1=_pad_last(s1, cin_p), b1=_pad_last(b1, cin_p),
        w1=_pad_mat(w1, cin_p, f_p).astype(jnp.bfloat16),
        s2=_pad_last(s2, f_p), b2=_pad_last(b2, f_p))


# ----------------------------------------------------------------------------
# Forward pass (Pallas) and pure-JAX reference
# ----------------------------------------------------------------------------
def inverted_residual_forward(x_nchw, params, inp, oup, stride):
    """x_nchw: (B, inp, H, W) float32 -> (B, oup, Ho, Wo) float32, NCHW."""
    if not 1 <= stride <= 3:
        raise ValueError("Illegal Stride Value")
    B, C, H, W = x_nchw.shape
    assert C == inp
    bf = oup // 2
    assert stride != 1 or inp == bf * 2
    Ho = (H - 1) // stride + 1
    Wo = (W - 1) // stride + 1
    f_p = _round_up(bf, LANE)

    x_nhwc = jnp.transpose(x_nchw, (0, 2, 3, 1)).astype(jnp.float32)

    if stride == 1:
        # Passthrough half stays untouched (exact).  The branch2 half is sliced,
        # zero-padded to a lane-dense channel count, cast to bf16 for the MXU and
        # flattened to (B, H*W, Cp) in one fused XLA producer.
        y1 = x_nhwc[..., :bf]
        x2 = _pad_last(x_nhwc[..., bf:], f_p).astype(jnp.bfloat16)
        x2 = x2.reshape(B, H * W, f_p)
        y2 = _run_branch2(x2, _prep_branch2(params, f_p, f_p), H, W, stride)
        y2 = y2.reshape(B, Ho, Wo, f_p)[..., :bf]
    else:
        cin_p = _round_up(inp, LANE)
        xf = _pad_last(x_nhwc, cin_p).astype(jnp.bfloat16).reshape(B, H * W, cin_p)
        p1 = _prep_branch1(params, cin_p, f_p)
        p2 = _prep_branch2(params, cin_p, f_p)
        y1, y2 = _run_fused_downsample(xf, p1, p2, H, W, stride)
        y1 = y1.reshape(B, Ho, Wo, f_p)[..., :bf]
        y2 = y2.reshape(B, Ho, Wo, f_p)[..., :bf]

    # concat(dim=C) followed by channel_shuffle(g=2) == channel interleave.
    # Kept as XLA glue; it fuses with the mandatory NHWC->NCHW transpose.
    out_nhwc = jnp.stack([y1, y2], axis=-1).reshape(B, Ho, Wo, 2 * bf)
    return jnp.transpose(out_nhwc, (0, 3, 1, 2))


def _conv2d_ref(x, w, stride=1, padding=0, groups=1):
    return lax.conv_general_dilated(
        x, w, window_strides=(stride, stride),
        padding=((padding, padding), (padding, padding)),
        feature_group_count=groups,
        dimension_numbers=("NCHW", "OIHW", "NCHW"))


def _bn_ref(x, bn):
    gamma, beta, mean, var = bn
    inv = gamma / jnp.sqrt(var + BN_EPS)
    return (x - mean[None, :, None, None]) * inv[None, :, None, None] \
        + beta[None, :, None, None]


def channel_shuffle_ref(x, g):
    B, C, H, W = x.shape
    x = x.reshape(B, g, C // g, H, W)
    x = jnp.transpose(x, (0, 2, 1, 3, 4))
    return x.reshape(B, C, H, W)


def inverted_residual_ref(x, params, inp, oup, stride):
    bf = oup // 2

    def branch2(z):
        z = _conv2d_ref(z, params["b2_pw1_w"])
        z = jax.nn.relu(_bn_ref(z, params["b2_bn1"]))
        z = _conv2d_ref(z, params["b2_dw_w"], stride=stride, padding=1, groups=bf)
        z = _bn_ref(z, params["b2_bn2"])
        z = _conv2d_ref(z, params["b2_pw2_w"])
        z = jax.nn.relu(_bn_ref(z, params["b2_bn3"]))
        return z

    if stride == 1:
        x1, x2 = x[:, :bf], x[:, bf:]
        out = jnp.concatenate([x1, branch2(x2)], axis=1)
    else:
        def branch1(z):
            z = _conv2d_ref(z, params["b1_dw_w"], stride=stride, padding=1, groups=inp)
            z = _bn_ref(z, params["b1_bn1"])
            z = _conv2d_ref(z, params["b1_pw_w"])
            z = jax.nn.relu(_bn_ref(z, params["b1_bn2"]))
            return z
        out = jnp.concatenate([branch1(x), branch2(x)], axis=1)
    return channel_shuffle_ref(out, 2)


# ----------------------------------------------------------------------------
if __name__ == "__main__":
    # Block c): stride=1 basic unit (requires inp == 2 * (oup // 2)).
    B, inp, oup, stride = 2, 4, 4, 1
    H = W = 16

    key = jax.random.PRNGKey(0)
    kx, kp = jax.random.split(key)
    x = jax.random.normal(kx, (B, inp, H, W), jnp.float32)
    params = init_params(kp, inp, oup, stride)

    out = inverted_residual_forward(x, params, inp, oup, stride)
    out = jax.block_until_ready(out)

    ref = inverted_residual_ref(x, params, inp, oup, stride)
    # Kernel uses bf16 MXU operands with f32 accumulation; the reference is all-f32,
    # hence the loosened tolerance (semantic bugs would show up as O(0.1-1) errors).
    np.testing.assert_allclose(np.asarray(out), np.asarray(ref),
                               rtol=3e-2, atol=3e-2)
    # TODO(synk): BatchNorm is reproduced in inference (eval) mode only; training-mode
    # batch statistics are not computed in the kernel.
    print("KERNEL_OK")
</pallas_src>

<mosaic_0001>
module attributes {stable_mosaic.version = 11 : i64} {
  func.func @_branch2_kernel(%arg0: i32, %arg1: memref<1x256x128xbf16, #tpu.memory_space<vmem>>, %arg2: memref<128x128xbf16, #tpu.memory_space<vmem>>, %arg3: memref<1x128xf32, #tpu.memory_space<vmem>>, %arg4: memref<1x128xf32, #tpu.memory_space<vmem>>, %arg5: memref<3x3x128xf32, #tpu.memory_space<vmem>>, %arg6: memref<1x128xf32, #tpu.memory_space<vmem>>, %arg7: memref<1x128xf32, #tpu.memory_space<vmem>>, %arg8: memref<128x128xbf16, #tpu.memory_space<vmem>>, %arg9: memref<1x128xf32, #tpu.memory_space<vmem>>, %arg10: memref<1x128xf32, #tpu.memory_space<vmem>>, %arg11: memref<1x256x128xf32, #tpu.memory_space<vmem>>, %arg12: memref<18x32x128xf32, #tpu.memory_space<vmem>>) attributes {dimension_semantics = [#tpu.dimension_semantics<parallel>], iteration_bounds = array<i64: 2>, scalar_prefetch = 0 : i64, scratch_operands = 1 : i64, tpu.core_type = #tpu.core_type<tc>, window_params = [{transform_indices = @transform_0, window_bounds = array<i64: 1, 256, 128>}, {pipeline_mode = #tpu.pipeline_mode<synchronous>, transform_indices = @transform_1, window_bounds = array<i64: 128, 128>}, {pipeline_mode = #tpu.pipeline_mode<synchronous>, transform_indices = @transform_2, window_bounds = array<i64: 1, 128>}, {pipeline_mode = #tpu.pipeline_mode<synchronous>, transform_indices = @transform_3, window_bounds = array<i64: 1, 128>}, {pipeline_mode = #tpu.pipeline_mode<synchronous>, transform_indices = @transform_4, window_bounds = array<i64: 3, 3, 128>}, {pipeline_mode = #tpu.pipeline_mode<synchronous>, transform_indices = @transform_5, window_bounds = array<i64: 1, 128>}, {pipeline_mode = #tpu.pipeline_mode<synchronous>, transform_indices = @transform_6, window_bounds = array<i64: 1, 128>}, {pipeline_mode = #tpu.pipeline_mode<synchronous>, transform_indices = @transform_7, window_bounds = array<i64: 128, 128>}, {pipeline_mode = #tpu.pipeline_mode<synchronous>, transform_indices = @transform_8, window_bounds = array<i64: 1, 128>}, {pipeline_mode = #tpu.pipeline_mode<synchronous>, transform_indices = @transform_9, window_bounds = array<i64: 1, 128>}, {transform_indices = @transform_10, window_bounds = array<i64: 1, 256, 128>}]} {
    %c0 = arith.constant 0 : index
    %c0_0 = arith.constant 0 : index
    %c0_1 = arith.constant 0 : index
    %0 = vector.load %arg1[%c0, %c0_0, %c0_1] : memref<1x256x128xbf16, #tpu.memory_space<vmem>>, vector<1x256x128xbf16>
    %1 = vector.shape_cast %0 : vector<1x256x128xbf16> to vector<256x128xbf16>
    %c0_2 = arith.constant 0 : index
    %c0_3 = arith.constant 0 : index
    %2 = vector.load %arg2[%c0_2, %c0_3] : memref<128x128xbf16, #tpu.memory_space<vmem>>, vector<128x128xbf16>
    %cst = arith.constant dense<0.000000e+00> : vector<256x128xf32>
    %3 = tpu.matmul %1, %2, %cst {dimension_numbers = #tpu.dot_dimension_numbers<[1], [0], [0], [1], [0, 0, 1, 1], [], []>} : vector<256x128xbf16>, vector<128x128xbf16>, vector<256x128xf32> -> vector<256x128xf32>
    %c0_4 = arith.constant 0 : index
    %c0_5 = arith.constant 0 : index
    %4 = vector.load %arg3[%c0_4, %c0_5] : memref<1x128xf32, #tpu.memory_space<vmem>>, vector<1x128xf32>
    %5 = vector.broadcast %4 : vector<1x128xf32> to vector<256x128xf32>
    %6 = arith.mulf %3, %5 : vector<256x128xf32>
    %c0_6 = arith.constant 0 : index
    %c0_7 = arith.constant 0 : index
    %7 = vector.load %arg4[%c0_6, %c0_7] : memref<1x128xf32, #tpu.memory_space<vmem>>, vector<1x128xf32>
    %8 = vector.broadcast %7 : vector<1x128xf32> to vector<256x128xf32>
    %9 = arith.addf %6, %8 : vector<256x128xf32>
    %cst_8 = arith.constant 0.000000e+00 : f32
    %10 = vector.broadcast %cst_8 : f32 to vector<256x128xf32>
    %11 = arith.maximumf %9, %10 : vector<256x128xf32>
    %c0_9 = arith.constant 0 : index
    %c0_10 = arith.constant 0 : index
    %c0_11 = arith.constant 0 : index
    %12 = vector.load %arg5[%c0_9, %c0_10, %c0_11] : memref<3x3x128xf32, #tpu.memory_space<vmem>>, vector<3x3x128xf32>
    %cst_12 = arith.constant 0.000000e+00 : f32
    %13 = vector.broadcast %cst_12 : f32 to vector<32x128xf32>
    %c0_13 = arith.constant 0 : index
    %c0_14 = arith.constant 0 : index
    %c0_15 = arith.constant 0 : index
    %14 = vector.load %arg12[%c0_13, %c0_14, %c0_15] : memref<18x32x128xf32, #tpu.memory_space<vmem>>, vector<1x32x128xf32>
    %15 = vector.shape_cast %14 : vector<1x32x128xf32> to vector<32x128xf32>
    %16 = vector.shape_cast %13 : vector<32x128xf32> to vector<1x32x128xf32>
    tpu.vector_store %arg12[%c0_13, %c0_14, %c0_15], %16 {strides = array<i32>} : memref<18x32x128xf32, #tpu.memory_space<vmem>>, vector<1x32x128xf32>,
    %c17 = arith.constant 17 : index
    %c0_16 = arith.constant 0 : index
    %c0_17 = arith.constant 0 : index
    %17 = vector.load %arg12[%c17, %c0_16, %c0_17] : memref<18x32x128xf32, #tpu.memory_space<vmem>>, vector<1x32x128xf32>
    %18 = vector.shape_cast %17 : vector<1x32x128xf32> to vector<32x128xf32>
    %19 = vector.shape_cast %13 : vector<32x128xf32> to vector<1x32x128xf32>
    tpu.vector_store %arg12[%c17, %c0_16, %c0_17], %19 {strides = array<i32>} : memref<18x32x128xf32, #tpu.memory_space<vmem>>, vector<1x32x128xf32>,
    %cst_18 = arith.constant 0.000000e+00 : f32
    %20 = vector.broadcast %cst_18 : f32 to vector<16x1x128xf32>
    %c1 = arith.constant 1 : index
    %c7 = arith.constant 7 : index
    %c0_19 = arith.constant 0 : index
    %21 = vector.load %arg12[%c1, %c7, %c0_19] : memref<18x32x128xf32, #tpu.memory_space<vmem>>, vector<16x1x128xf32>
    tpu.vector_store %arg12[%c1, %c7, %c0_19], %20 {strides = array<i32>} : memref<18x32x128xf32, #tpu.memory_space<vmem>>, vector<16x1x128xf32>,
    %c1_20 = arith.constant 1 : index
    %c24 = arith.constant 24 : index
    %c0_21 = arith.constant 0 : index
    %22 = vector.load %arg12[%c1_20, %c24, %c0_21] : memref<18x32x128xf32, #tpu.memory_space<vmem>>, vector<16x1x128xf32>
    tpu.vector_store %arg12[%c1_20, %c24, %c0_21], %20 {strides = array<i32>} : memref<18x32x128xf32, #tpu.memory_space<vmem>>, vector<16x1x128xf32>,
    %23 = vector.shape_cast %11 : vector<256x128xf32> to vector<16x16x128xf32>
    %c1_22 = arith.constant 1 : index
    %c8 = arith.constant 8 : index
    %c0_23 = arith.constant 0 : index
    %24 = vector.load %arg12[%c1_22, %c8, %c0_23] : memref<18x32x128xf32, #tpu.memory_space<vmem>>, vector<16x16x128xf32>
    tpu.vector_store %arg12[%c1_22, %c8, %c0_23], %23 {strides = array<i32>} : memref<18x32x128xf32, #tpu.memory_space<vmem>>, vector<16x16x128xf32>,
    %cst_24 = arith.constant 0.000000e+00 : f32
    %25 = vector.broadcast %cst_24 : f32 to vector<16x16x128xf32>
    %c0_25 = arith.constant 0 : index
    %c7_26 = arith.constant 7 : index
    %c0_27 = arith.constant 0 : index
    %26 = vector.load %arg12[%c0_25, %c7_26, %c0_27] : memref<18x32x128xf32, #tpu.memory_space<vmem>>, vector<16x16x128xf32>
    %27 = vector.extract_strided_slice %12 {offsets = [0, 0, 0], sizes = [1, 1, 128], strides = [1, 1, 1]} : vector<3x3x128xf32> to vector<1x1x128xf32>
    %28 = vector.shape_cast %27 : vector<1x1x128xf32> to vector<128xf32>
    %29 = vector.shape_cast %28 : vector<128xf32> to vector<1x1x128xf32>
    %30 = vector.broadcast %29 : vector<1x1x128xf32> to vector<16x16x128xf32>
    %31 = arith.mulf %26, %30 : vector<16x16x128xf32>
    %32 = arith.addf %25, %31 : vector<16x16x128xf32>
    %c0_28 = arith.constant 0 : index
    %c8_29 = arith.constant 8 : index
    %c0_30 = arith.constant 0 : index
    %33 = vector.load %arg12[%c0_28, %c8_29, %c0_30] : memref<18x32x128xf32, #tpu.memory_space<vmem>>, vector<16x16x128xf32>
    %34 = vector.extract_strided_slice %12 {offsets = [0, 1, 0], sizes = [1, 1, 128], strides = [1, 1, 1]} : vector<3x3x128xf32> to vector<1x1x128xf32>
    %35 = vector.shape_cast %34 : vector<1x1x128xf32> to vector<128xf32>
    %36 = vector.shape_cast %35 : vector<128xf32> to vector<1x1x128xf32>
    %37 = vector.broadcast %36 : vector<1x1x128xf32> to vector<16x16x128xf32>
    %38 = arith.mulf %33, %37 : vector<16x16x128xf32>
    %39 = arith.addf %32, %38 : vector<16x16x128xf32>
    %c0_31 = arith.constant 0 : index
    %c9 = arith.constant 9 : index
    %c0_32 = arith.constant 0 : index
    %40 = vector.load %arg12[%c0_31, %c9, %c0_32] : memref<18x32x128xf32, #tpu.memory_space<vmem>>, vector<16x16x128xf32>
    %41 = vector.extract_strided_slice %12 {offsets = [0, 2, 0], sizes = [1, 1, 128], strides = [1, 1, 1]} : vector<3x3x128xf32> to vector<1x1x128xf32>
    %42 = vector.shape_cast %41 : vector<1x1x128xf32> to vector<128xf32>
    %43 = vector.shape_cast %42 : vector<128xf32> to vector<1x1x128xf32>
    %44 = vector.broadcast %43 : vector<1x1x128xf32> to vector<16x16x128xf32>
    %45 = arith.mulf %40, %44 : vector<16x16x128xf32>
    %46 = arith.addf %39, %45 : vector<16x16x128xf32>
    %c1_33 = arith.constant 1 : index
    %c7_34 = arith.constant 7 : index
    %c0_35 = arith.constant 0 : index
    %47 = vector.load %arg12[%c1_33, %c7_34, %c0_35] : memref<18x32x128xf32, #tpu.memory_space<vmem>>, vector<16x16x128xf32>
    %48 = vector.extract_strided_slice %12 {offsets = [1, 0, 0], sizes = [1, 1, 128], strides = [1, 1, 1]} : vector<3x3x128xf32> to vector<1x1x128xf32>
    %49 = vector.shape_cast %48 : vector<1x1x128xf32> to vector<128xf32>
    %50 = vector.shape_cast %49 : vector<128xf32> to vector<1x1x128xf32>
    %51 = vector.broadcast %50 : vector<1x1x128xf32> to vector<16x16x128xf32>
    %52 = arith.mulf %47, %51 : vector<16x16x128xf32>
    %53 = arith.addf %46, %52 : vector<16x16x128xf32>
    %c1_36 = arith.constant 1 : index
    %c8_37 = arith.constant 8 : index
    %c0_38 = arith.constant 0 : index
    %54 = vector.load %arg12[%c1_36, %c8_37, %c0_38] : memref<18x32x128xf32, #tpu.memory_space<vmem>>, vector<16x16x128xf32>
    %55 = vector.extract_strided_slice %12 {offsets = [1, 1, 0], sizes = [1, 1, 128], strides = [1, 1, 1]} : vector<3x3x128xf32> to vector<1x1x128xf32>
    %56 = vector.shape_cast %55 : vector<1x1x128xf32> to vector<128xf32>
    %57 = vector.shape_cast %56 : vector<128xf32> to vector<1x1x128xf32>
    %58 = vector.broadcast %57 : vector<1x1x128xf32> to vector<16x16x128xf32>
    %59 = arith.mulf %54, %58 : vector<16x16x128xf32>
    %60 = arith.addf %53, %59 : vector<16x16x128xf32>
    %c1_39 = arith.constant 1 : index
    %c9_40 = arith.constant 9 : index
    %c0_41 = arith.constant 0 : index
    %61 = vector.load %arg12[%c1_39, %c9_40, %c0_41] : memref<18x32x128xf32, #tpu.memory_space<vmem>>, vector<16x16x128xf32>
    %62 = vector.extract_strided_slice %12 {offsets = [1, 2, 0], sizes = [1, 1, 128], strides = [1, 1, 1]} : vector<3x3x128xf32> to vector<1x1x128xf32>
    %63 = vector.shape_cast %62 : vector<1x1x128xf32> to vector<128xf32>
    %64 = vector.shape_cast %63 : vector<128xf32> to vector<1x1x128xf32>
    %65 = vector.broadcast %64 : vector<1x1x128xf32> to vector<16x16x128xf32>
    %66 = arith.mulf %61, %65 : vector<16x16x128xf32>
    %67 = arith.addf %60, %66 : vector<16x16x128xf32>
    %c2 = arith.constant 2 : index
    %c7_42 = arith.constant 7 : index
    %c0_43 = arith.constant 0 : index
    %68 = vector.load %arg12[%c2, %c7_42, %c0_43] : memref<18x32x128xf32, #tpu.memory_space<vmem>>, vector<16x16x128xf32>
    %69 = vector.extract_strided_slice %12 {offsets = [2, 0, 0], sizes = [1, 1, 128], strides = [1, 1, 1]} : vector<3x3x128xf32> to vector<1x1x128xf32>
    %70 = vector.shape_cast %69 : vector<1x1x128xf32> to vector<128xf32>
    %71 = vector.shape_cast %70 : vector<128xf32> to vector<1x1x128xf32>
    %72 = vector.broadcast %71 : vector<1x1x128xf32> to vector<16x16x128xf32>
    %73 = arith.mulf %68, %72 : vector<16x16x128xf32>
    %74 = arith.addf %67, %73 : vector<16x16x128xf32>
    %c2_44 = arith.constant 2 : index
    %c8_45 = arith.constant 8 : index
    %c0_46 = arith.constant 0 : index
    %75 = vector.load %arg12[%c2_44, %c8_45, %c0_46] : memref<18x32x128xf32, #tpu.memory_space<vmem>>, vector<16x16x128xf32>
    %76 = vector.extract_strided_slice %12 {offsets = [2, 1, 0], sizes = [1, 1, 128], strides = [1, 1, 1]} : vector<3x3x128xf32> to vector<1x1x128xf32>
    %77 = vector.shape_cast %76 : vector<1x1x128xf32> to vector<128xf32>
    %78 = vector.shape_cast %77 : vector<128xf32> to vector<1x1x128xf32>
    %79 = vector.broadcast %78 : vector<1x1x128xf32> to vector<16x16x128xf32>
    %80 = arith.mulf %75, %79 : vector<16x16x128xf32>
    %81 = arith.addf %74, %80 : vector<16x16x128xf32>
    %c2_47 = arith.constant 2 : index
    %c9_48 = arith.constant 9 : index
    %c0_49 = arith.constant 0 : index
    %82 = vector.load %arg12[%c2_47, %c9_48, %c0_49] : memref<18x32x128xf32, #tpu.memory_space<vmem>>, vector<16x16x128xf32>
    %83 = vector.extract_strided_slice %12 {offsets = [2, 2, 0], sizes = [1, 1, 128], strides = [1, 1, 1]} : vector<3x3x128xf32> to vector<1x1x128xf32>
    %84 = vector.shape_cast %83 : vector<1x1x128xf32> to vector<128xf32>
    %85 = vector.shape_cast %84 : vector<128xf32> to vector<1x1x128xf32>
    %86 = vector.broadcast %85 : vector<1x1x128xf32> to vector<16x16x128xf32>
    %87 = arith.mulf %82, %86 : vector<16x16x128xf32>
    %88 = arith.addf %81, %87 : vector<16x16x128xf32>
    %89 = vector.shape_cast %88 : vector<16x16x128xf32> to vector<256x128xf32>
    %c0_50 = arith.constant 0 : index
    %c0_51 = arith.constant 0 : index
    %90 = vector.load %arg6[%c0_50, %c0_51] : memref<1x128xf32, #tpu.memory_space<vmem>>, vector<1x128xf32>
    %91 = vector.broadcast %90 : vector<1x128xf32> to vector<256x128xf32>
    %92 = arith.mulf %89, %91 : vector<256x128xf32>
    %c0_52 = arith.constant 0 : index
    %c0_53 = arith.constant 0 : index
    %93 = vector.load %arg7[%c0_52, %c0_53] : memref<1x128xf32, #tpu.memory_space<vmem>>, vector<1x128xf32>
    %94 = vector.broadcast %93 : vector<1x128xf32> to vector<256x128xf32>
    %95 = arith.addf %92, %94 : vector<256x128xf32>
    %96 = arith.truncf %95 : vector<256x128xf32> to vector<256x128xbf16>
    %c0_54 = arith.constant 0 : index
    %c0_55 = arith.constant 0 : index
    %97 = vector.load %arg8[%c0_54, %c0_55] : memref<128x128xbf16, #tpu.memory_space<vmem>>, vector<128x128xbf16>
    %cst_56 = arith.constant dense<0.000000e+00> : vector<256x128xf32>
    %98 = tpu.matmul %96, %97, %cst_56 {dimension_numbers = #tpu.dot_dimension_numbers<[1], [0], [0], [1], [0, 0, 1, 1], [], []>} : vector<256x128xbf16>, vector<128x128xbf16>, vector<256x128xf32> -> vector<256x128xf32>
    %c0_57 = arith.constant 0 : index
    %c0_58 = arith.constant 0 : index
    %99 = vector.load %arg9[%c0_57, %c0_58] : memref<1x128xf32, #tpu.memory_space<vmem>>, vector<1x128xf32>
    %100 = vector.broadcast %99 : vector<1x128xf32> to vector<256x128xf32>
    %101 = arith.mulf %98, %100 : vector<256x128xf32>
    %c0_59 = arith.constant 0 : index
    %c0_60 = arith.constant 0 : index
    %102 = vector.load %arg10[%c0_59, %c0_60] : memref<1x128xf32, #tpu.memory_space<vmem>>, vector<1x128xf32>
    %103 = vector.broadcast %102 : vector<1x128xf32> to vector<256x128xf32>
    %104 = arith.addf %101, %103 : vector<256x128xf32>
    %cst_61 = arith.constant 0.000000e+00 : f32
    %105 = vector.broadcast %cst_61 : f32 to vector<256x128xf32>
    %106 = arith.maximumf %104, %105 : vector<256x128xf32>
    %c0_62 = arith.constant 0 : index
    %c0_63 = arith.constant 0 : index
    %c0_64 = arith.constant 0 : index
    %107 = vector.load %arg11[%c0_62, %c0_63, %c0_64] : memref<1x256x128xf32, #tpu.memory_space<vmem>>, vector<1x256x128xf32>
    %108 = vector.shape_cast %107 : vector<1x256x128xf32> to vector<256x128xf32>
    %109 = vector.shape_cast %106 : vector<256x128xf32> to vector<1x256x128xf32>
    tpu.vector_store %arg11[%c0_62, %c0_63, %c0_64], %109 {strides = array<i32>} : memref<1x256x128xf32, #tpu.memory_space<vmem>>, vector<1x256x128xf32>,
    return
  }
  func.func @transform_0(%arg0: i32) -> (i32, i32, i32) {
    %c0_i32 = arith.constant 0 : i32
    %c0_i32_0 = arith.constant 0 : i32
    %c0_i32_1 = arith.constant 0 : i32
    return %arg0, %c0_i32, %c0_i32_0 : i32, i32, i32
  }
  func.func @transform_1(%arg0: i32) -> (i32, i32) {
    %c0_i32 = arith.constant 0 : i32
    %c0_i32_0 = arith.constant 0 : i32
    %c0_i32_1 = arith.constant 0 : i32
    return %c0_i32, %c0_i32_0 : i32, i32
  }
  func.func @transform_2(%arg0: i32) -> (i32, i32) {
    %c0_i32 = arith.constant 0 : i32
    %c0_i32_0 = arith.constant 0 : i32
    %c0_i32_1 = arith.constant 0 : i32
    return %c0_i32, %c0_i32_0 : i32, i32
  }
  func.func @transform_3(%arg0: i32) -> (i32, i32) {
    %c0_i32 = arith.constant 0 : i32
    %c0_i32_0 = arith.constant 0 : i32
    %c0_i32_1 = arith.constant 0 : i32
    return %c0_i32, %c0_i32_0 : i32, i32
  }
  func.func @transform_4(%arg0: i32) -> (i32, i32, i32) {
    %c0_i32 = arith.constant 0 : i32
    %c0_i32_0 = arith.constant 0 : i32
    %c0_i32_1 = arith.constant 0 : i32
    %c0_i32_2 = arith.constant 0 : i32
    return %c0_i32, %c0_i32_0, %c0_i32_1 : i32, i32, i32
  }
  func.func @transform_5(%arg0: i32) -> (i32, i32) {
    %c0_i32 = arith.constant 0 : i32
    %c0_i32_0 = arith.constant 0 : i32
    %c0_i32_1 = arith.constant 0 : i32
    return %c0_i32, %c0_i32_0 : i32, i32
  }
  func.func @transform_6(%arg0: i32) -> (i32, i32) {
    %c0_i32 = arith.constant 0 : i32
    %c0_i32_0 = arith.constant 0 : i32
    %c0_i32_1 = arith.constant 0 : i32
    return %c0_i32, %c0_i32_0 : i32, i32
  }
  func.func @transform_7(%arg0: i32) -> (i32, i32) {
    %c0_i32 = arith.constant 0 : i32
    %c0_i32_0 = arith.constant 0 : i32
    %c0_i32_1 = arith.constant 0 : i32
    return %c0_i32, %c0_i32_0 : i32, i32
  }
  func.func @transform_8(%arg0: i32) -> (i32, i32) {
    %c0_i32 = arith.constant 0 : i32
    %c0_i32_0 = arith.constant 0 : i32
    %c0_i32_1 = arith.constant 0 : i32
    return %c0_i32, %c0_i32_0 : i32, i32
  }
  func.func @transform_9(%arg0: i32) -> (i32, i32) {
    %c0_i32 = arith.constant 0 : i32
    %c0_i32_0 = arith.constant 0 : i32
    %c0_i32_1 = arith.constant 0 : i32
    return %c0_i32, %c0_i32_0 : i32, i32
  }
  func.func @transform_10(%arg0: i32) -> (i32, i32, i32) {
    %c0_i32 = arith.constant 0 : i32
    %c0_i32_0 = arith.constant 0 : i32
    %c0_i32_1 = arith.constant 0 : i32
    return %arg0, %c0_i32, %c0_i32_0 : i32, i32, i32
  }
}

</mosaic_0001>

<llo_original>
// kernel: tpu_custom_call.1
$region0: #{tpu_custom_call.1}
  #allocation0 [shape = 'u32[]', space=smem, size = 0x4, offset = 0x4, fixed_abs, tag = 'smem constant byte address 0x4 - core index']
  #allocation1 [shape = 'u32[72,128]{1,0:T(1,128)}', space=vmem, size = 0x9000, scoped, tag = 'internal scratch']
  #allocation2 [shape = 'f32[18,32,128]{2,1,0:T(8,128)}', space=vmem, size = 0x48000, scoped, tag = 'scratch operand']
  %s0 = inlined_call_operand.hbm [shape: bf16[2,256,128], index: 0, kind: input, shape index: {}]
  %s1 = inlined_call_operand.hbm [shape: bf16[128,128], index: 1, kind: input, shape index: {}]
  %s2 = inlined_call_operand.vmem [shape: f32[1,128], index: 2, kind: input, shape index: {}]
  %s3 = inlined_call_operand.vmem [shape: f32[1,128], index: 3, kind: input, shape index: {}]
  %s4 = inlined_call_operand.hbm [shape: f32[3,3,128], index: 4, kind: input, shape index: {}]
  %s5 = inlined_call_operand.vmem [shape: f32[1,128], index: 5, kind: input, shape index: {}]
  %s6 = inlined_call_operand.vmem [shape: f32[1,128], index: 6, kind: input, shape index: {}]
  %s7 = inlined_call_operand.hbm [shape: bf16[128,128], index: 7, kind: input, shape index: {}]
  %s8 = inlined_call_operand.vmem [shape: f32[1,128], index: 8, kind: input, shape index: {}]
  %s9 = inlined_call_operand.vmem [shape: f32[1,128], index: 9, kind: input, shape index: {}]
  %s10 = inlined_call_operand.hbm [shape: f32[2,256,128], index: 10, kind: output, shape index: {}]
  %s11 = sld [smem:[#allocation0]]
  $region89: #{tpu_custom_call.1} parent=0
    _
  %s13 = ssub.s32 1, %s11
  %s14 = scalar_select 0, %s13, %s11
  $region1: #{tpu_custom_call.1} parent=0
    #allocation3 [shape = 'u8[131072]{0}', space=vmem, size = 0x20000, scoped, tag = 'input window, operand 0']
    #allocation4 [shape = 's32[2]{0}', space=sflag, size = 0x8, scoped, tag = 'scoped memory for tpu_custom_call.1']
    #allocation5 [shape = 's32[2]{0}', space=sflag, size = 0x8, scoped, tag = 'scoped memory for tpu_custom_call.1']
    #allocation6 [shape = 'u8[32768]{0}', space=vmem, size = 0x8000, scoped, tag = 'input window, operand 1, single buffered']
    #allocation7 [shape = 's32[1]{0}', space=sflag, size = 0x4, scoped, tag = 'scoped memory for tpu_custom_call.1']
    #allocation8 [shape = 'u8[6144]{0}', space=vmem, size = 0x1800, scoped, tag = 'input window, operand 4, single buffered']
    #allocation9 [shape = 'u8[32768]{0}', space=vmem, size = 0x8000, scoped, tag = 'input window, operand 7, single buffered']
    #allocation10 [shape = 's32[1]{0}', space=sflag, size = 0x4, scoped, tag = 'scoped memory for tpu_custom_call.1']
    #allocation11 [shape = 'u8[262144]{0}', space=vmem, size = 0x40000, scoped, tag = 'output window, operand 0']
    %15 = vsyncpa [#allocation4], 0
    %s16 = scalar_lea.sflag [#allocation4], 1
    %17 = vsyncpa %s16, 0
    %18 = vsyncpa [#allocation7], 0
    %19 = vsyncpa [#allocation10], 0
    %20 = vsyncpa [#allocation5], 0
    %s21 = scalar_lea.sflag [#allocation5], 1
    %22 = vsyncpa %s21, 0
    loop: start=0, step=1, limit=4
    $region2: #{tpu_custom_call.1} parent=1 // loop_pre_header
      _
    $region3: #{tpu_custom_call.1} parent=1 // loop_header
      %s24 = sphi 0, %s28
      %p25 = scmp.ge.s32.totalorder %s24, 4
      %s34 = sphi 0, %s36
      %s37 = sphi 0, %s34
      %s38 = sphi 0, %s37
      %s54 = sphi 0, %s38
      %s58 = sphi 0, %s58
      %s60 = sphi 0, %s58
      %s61 = sphi 0, %s60
      %s75 = sphi 0, %s61
      %s79 = sphi 0, %s79
      %s81 = sphi 0, %s79
      %s82 = sphi 0, %s81
      %s96 = sphi 0, %s82
      %s100 = sphi 0, %s100
      %s102 = sphi 0, %s100
      %s103 = sphi 0, %s102
      %s117 = sphi 0, %s103
      %s121 = sphi 0, %s121
      %s123 = sphi 0, %s121
      %s124 = sphi 0, %s123
      %s138 = sphi 0, %s124
      %s142 = sphi 0, %s142
      %s144 = sphi 0, %s142
      %s145 = sphi 0, %s144
      %s159 = sphi 0, %s145
      %s163 = sphi 0, %s163
      %s165 = sphi 0, %s163
      %s166 = sphi 0, %s165
      %s180 = sphi 0, %s166
      %s184 = sphi 0, %s184
      %s186 = sphi 0, %s184
      %s187 = sphi 0, %s186
      %s201 = sphi 0, %s187
      %s205 = sphi 0, %s205
      %s207 = sphi 0, %s205
      %s208 = sphi 0, %s207
      %s222 = sphi 0, %s208
      %s226 = sphi 0, %s226
      %s228 = sphi 0, %s226
      %s229 = sphi 0, %s228
      %s243 = sphi 0, %s229
      %s249 = sphi 0, %s251
      %s252 = sphi 0, %s249
      %s253 = sphi 0, %s252
      %s269 = sphi 0, %s253
    $region4: #{tpu_custom_call.1} parent=1 // loop_header_branch
      %27 = sbr.rel (%p25) target = $region8
    $region5: #{tpu_custom_call.1} parent=1 // loop_body
      %s29 = ssub.s32 %s24, 1
      %s30 = ssub.s32 %s24, 2
      %s31 = sadd.s32 %s24, 1
      %s32 = ssub.s32 %s24, %s31
      %p33 = scmp.eq.s32.totalorder %s32, 0
      %s35 = sadd.s32 %s34, 1
      %s36 = scalar_select %p33, %s34, %s35
      %p39 = pneg %p33
      %p40 = scmp.eq.s32.totalorder %s24, 1
      %p41 = por %p39, %p40
      %p42 = scmp.ne.s32.totalorder %s34, %s37
      %p43 = scmp.eq.s32.totalorder %s24, 0
      %p44 = por %p42, %p43
      %p45 = scmp.ne.s32.totalorder %s34, %s37
      %p46 = scmp.eq.s32.totalorder %s29, 1
      %p47 = por %p45, %p46
      %p48 = scmp.ne.s32.totalorder %s37, %s38
      %p49 = scmp.eq.s32.totalorder %s29, 0
      %p50 = por %p48, %p49
      %p51 = scmp.ne.s32.totalorder %s37, %s38
      %p52 = scmp.eq.s32.totalorder %s30, 1
      %p53 = por %p51, %p52
      %p55 = scmp.ne.s32.totalorder %s38, %s54
      %p56 = scmp.eq.s32.totalorder %s30, 0
      %p57 = por %p55, %p56
      %s59 = sadd.s32 %s58, 1
      %p62 = scmp.eq.s32.totalorder %s24, 1
      %p63 = scmp.ne.s32.totalorder %s58, %s60
      %p64 = scmp.eq.s32.totalorder %s24, 0
      %p65 = por %p63, %p64
      %p66 = scmp.ne.s32.totalorder %s58, %s60
      %p67 = scmp.eq.s32.totalorder %s29, 1
      %p68 = por %p66, %p67
      %p69 = scmp.ne.s32.totalorder %s60, %s61
      %p70 = scmp.eq.s32.totalorder %s29, 0
      %p71 = por %p69, %p70
      %p72 = scmp.ne.s32.totalorder %s60, %s61
      %p73 = scmp.eq.s32.totalorder %s30, 1
      %p74 = por %p72, %p73
      %p76 = scmp.ne.s32.totalorder %s61, %s75
      %p77 = scmp.eq.s32.totalorder %s30, 0
      %p78 = por %p76, %p77
      %s80 = sadd.s32 %s79, 1
      %p83 = scmp.eq.s32.totalorder %s24, 1
      %p84 = scmp.ne.s32.totalorder %s79, %s81
      %p85 = scmp.eq.s32.totalorder %s24, 0
      %p86 = por %p84, %p85
      %p87 = scmp.ne.s32.totalorder %s79, %s81
      %p88 = scmp.eq.s32.totalorder %s29, 1
      %p89 = por %p87, %p88
      %p90 = scmp.ne.s32.totalorder %s81, %s82
      %p91 = scmp.eq.s32.totalorder %s29, 0
      %p92 = por %p90, %p91
      %p93 = scmp.ne.s32.totalorder %s81, %s82
      %p94 = scmp.eq.s32.totalorder %s30, 1
      %p95 = por %p93, %p94
      %p97 = scmp.ne.s32.totalorder %s82, %s96
      %p98 = scmp.eq.s32.totalorder %s30, 0
      %p99 = por %p97, %p98
      %s101 = sadd.s32 %s100, 1
      %p104 = scmp.eq.s32.totalorder %s24, 1
      %p105 = scmp.ne.s32.totalorder %s100, %s102
      %p106 = scmp.eq.s32.totalorder %s24, 0
      %p107 = por %p105, %p106
      %p108 = scmp.ne.s32.totalorder %s100, %s102
      %p109 = scmp.eq.s32.totalorder %s29, 1
      %p110 = por %p108, %p109
      %p111 = scmp.ne.s32.totalorder %s102, %s103
      %p112 = scmp.eq.s32.totalorder %s29, 0
      %p113 = por %p111, %p112
      %p114 = scmp.ne.s32.totalorder %s102, %s103
      %p115 = scmp.eq.s32.totalorder %s30, 1
      %p116 = por %p114, %p115
      %p118 = scmp.ne.s32.totalorder %s103, %s117
      %p119 = scmp.eq.s32.totalorder %s30, 0
      %p120 = por %p118, %p119
      %s122 = sadd.s32 %s121, 1
      %p125 = scmp.eq.s32.totalorder %s24, 1
      %p126 = scmp.ne.s32.totalorder %s121, %s123
      %p127 = scmp.eq.s32.totalorder %s24, 0
      %p128 = por %p126, %p127
      %p129 = scmp.ne.s32.totalorder %s121, %s123
      %p130 = scmp.eq.s32.totalorder %s29, 1
      %p131 = por %p129, %p130
      %p132 = scmp.ne.s32.totalorder %s123, %s124
      %p133 = scmp.eq.s32.totalorder %s29, 0
      %p134 = por %p132, %p133
      %p135 = scmp.ne.s32.totalorder %s123, %s124
      %p136 = scmp.eq.s32.totalorder %s30, 1
      %p137 = por %p135, %p136
      %p139 = scmp.ne.s32.totalorder %s124, %s138
      %p140 = scmp.eq.s32.totalorder %s30, 0
      %p141 = por %p139, %p140
      %s143 = sadd.s32 %s142, 1
      %p146 = scmp.eq.s32.totalorder %s24, 1
      %p147 = scmp.ne.s32.totalorder %s142, %s144
      %p148 = scmp.eq.s32.totalorder %s24, 0
      %p149 = por %p147, %p148
      %p150 = scmp.ne.s32.totalorder %s142, %s144
      %p151 = scmp.eq.s32.totalorder %s29, 1
      %p152 = por %p150, %p151
      %p153 = scmp.ne.s32.totalorder %s144, %s145
      %p154 = scmp.eq.s32.totalorder %s29, 0
      %p155 = por %p153, %p154
      %p156 = scmp.ne.s32.totalorder %s144, %s145
      %p157 = scmp.eq.s32.totalorder %s30, 1
      %p158 = por %p156, %p157
      %p160 = scmp.ne.s32.totalorder %s145, %s159
      %p161 = scmp.eq.s32.totalorder %s30, 0
      %p162 = por %p160, %p161
      %s164 = sadd.s32 %s163, 1
      %p167 = scmp.eq.s32.totalorder %s24, 1
      %p168 = scmp.ne.s32.totalorder %s163, %s165
      %p169 = scmp.eq.s32.totalorder %s24, 0
      %p170 = por %p168, %p169
      %p171 = scmp.ne.s32.totalorder %s163, %s165
      %p172 = scmp.eq.s32.totalorder %s29, 1
      %p173 = por %p171, %p172
      %p174 = scmp.ne.s32.totalorder %s165, %s166
      %p175 = scmp.eq.s32.totalorder %s29, 0
      %p176 = por %p174, %p175
      %p177 = scmp.ne.s32.totalorder %s165, %s166
      %p178 = scmp.eq.s32.totalorder %s30, 1
      %p179 = por %p177, %p178
      %p181 = scmp.ne.s32.totalorder %s166, %s180
      %p182 = scmp.eq.s32.totalorder %s30, 0
      %p183 = por %p181, %p182
      %s185 = sadd.s32 %s184, 1
      %p188 = scmp.eq.s32.totalorder %s24, 1
      %p189 = scmp.ne.s32.totalorder %s184, %s186
      %p190 = scmp.eq.s32.totalorder %s24, 0
      %p191 = por %p189, %p190
      %p192 = scmp.ne.s32.totalorder %s184, %s186
      %p193 = scmp.eq.s32.totalorder %s29, 1
      %p194 = por %p192, %p193
      %p195 = scmp.ne.s32.totalorder %s186, %s187
      %p196 = scmp.eq.s32.totalorder %s29, 0
      %p197 = por %p195, %p196
      %p198 = scmp.ne.s32.totalorder %s186, %s187
      %p199 = scmp.eq.s32.totalorder %s30, 1
      %p200 = por %p198, %p199
      %p202 = scmp.ne.s32.totalorder %s187, %s201
      %p203 = scmp.eq.s32.totalorder %s30, 0
      %p204 = por %p202, %p203
      %s206 = sadd.s32 %s205, 1
      %p209 = scmp.eq.s32.totalorder %s24, 1
      %p210 = scmp.ne.s32.totalorder %s205, %s207
      %p211 = scmp.eq.s32.totalorder %s24, 0
      %p212 = por %p210, %p211
      %p213 = scmp.ne.s32.totalorder %s205, %s207
      %p214 = scmp.eq.s32.totalorder %s29, 1
      %p215 = por %p213, %p214
      %p216 = scmp.ne.s32.totalorder %s207, %s208
      %p217 = scmp.eq.s32.totalorder %s29, 0
      %p218 = por %p216, %p217
      %p219 = scmp.ne.s32.totalorder %s207, %s208
      %p220 = scmp.eq.s32.totalorder %s30, 1
      %p221 = por %p219, %p220
      %p223 = scmp.ne.s32.totalorder %s208, %s222
      %p224 = scmp.eq.s32.totalorder %s30, 0
      %p225 = por %p223, %p224
      %s227 = sadd.s32 %s226, 1
      %p230 = scmp.eq.s32.totalorder %s24, 1
      %p231 = scmp.ne.s32.totalorder %s226, %s228
      %p232 = scmp.eq.s32.totalorder %s24, 0
      %p233 = por %p231, %p232
      %p234 = scmp.ne.s32.totalorder %s226, %s228
      %p235 = scmp.eq.s32.totalorder %s29, 1
      %p236 = por %p234, %p235
      %p237 = scmp.ne.s32.totalorder %s228, %s229
      %p238 = scmp.eq.s32.totalorder %s29, 0
      %p239 = por %p237, %p238
      %p240 = scmp.ne.s32.totalorder %s228, %s229
      %p241 = scmp.eq.s32.totalorder %s30, 1
      %p242 = por %p240, %p241
      %p244 = scmp.ne.s32.totalorder %s229, %s243
      %p245 = scmp.eq.s32.totalorder %s30, 0
      %p246 = por %p244, %p245
      %s247 = ssub.s32 %s24, %s31
      %p248 = scmp.eq.s32.totalorder %s247, 0
      %s250 = sadd.s32 %s249, 1
      %s251 = scalar_select %p248, %s249, %s250
      %p254 = pneg %p248
      %p255 = scmp.eq.s32.totalorder %s24, 1
      %p256 = por %p254, %p255
      %p257 = scmp.ne.s32.totalorder %s249, %s252
      %p258 = scmp.eq.s32.totalorder %s24, 0
      %p259 = por %p257, %p258
      %p260 = scmp.ne.s32.totalorder %s249, %s252
      %p261 = scmp.eq.s32.totalorder %s29, 1
      %p262 = por %p260, %p261
      %p263 = scmp.ne.s32.totalorder %s252, %s253
      %p264 = scmp.eq.s32.totalorder %s29, 0
      %p265 = por %p263, %p264
      %p266 = scmp.ne.s32.totalorder %s252, %s253
      %p267 = scmp.eq.s32.totalorder %s30, 1
      %p268 = por %p266, %p267
      %p270 = scmp.ne.s32.totalorder %s253, %s269
      %p271 = scmp.eq.s32.totalorder %s30, 0
      %p272 = por %p270, %p271
      %p273 = scmp.le.s32.totalorder 1, %s24
      %p274 = scmp.lt.s32.totalorder %s24, 3
      %p275 = pnand %p273, %p274
      %p276 = pneg %p275
      // Predicated region
      $region9: #{tpu_custom_call.1} parent=5 // pred_check
        _
      $region10: #{tpu_custom_call.1} parent=5 // pred_check_branch
        %278 = sbr.rel (%p275) target = $region12
      $region11: #{tpu_custom_call.1} parent=5 // pred_region
        %s279 = ssub.s32 %s24, 1
        // Predicated region
        $region13: #{tpu_custom_call.1} parent=11 // pred_check
          %p280 = pneg %p71
        $region14: #{tpu_custom_call.1} parent=11 // pred_check_branch
          %282 = sbr.rel (%p280) target = $region16
        $region15: #{tpu_custom_call.1} parent=11 // pred_region
          %284 = vsyncadd [#allocation7], 0
          %s285 = sshll.u32 %s1, 4
          %s286 = int_to_ptr.hbm [resolvable:$true] %s285
          %s287 = sshll.u32 [#allocation6], 4
          %s288 = int_to_ptr.vmem [resolvable:$true] %s287
          %293 = dma.hbm_to_vmem [thread:$0]  %s286, 1024, %s288, [#allocation7], 64, 64, 4
        $region16: #{tpu_custom_call.1} parent=11 // pred_fallthru
          _
        // Predicated region
        $region17: #{tpu_custom_call.1} parent=11 // pred_check
          %p294 = pneg %p92
        $region18: #{tpu_custom_call.1} parent=11 // pred_check_branch
          %296 = sbr.rel (%p294) target = $region20
        $region19: #{tpu_custom_call.1} parent=11 // pred_region
          _
        $region20: #{tpu_custom_call.1} parent=11 // pred_fallthru
          _
        // Predicated region
        $region21: #{tpu_custom_call.1} parent=11 // pred_check
          %p297 = pneg %p113
        $region22: #{tpu_custom_call.1} parent=11 // pred_check_branch
          %299 = sbr.rel (%p297) target = $region24
        $region23: #{tpu_custom_call.1} parent=11 // pred_region
          _
        $region24: #{tpu_custom_call.1} parent=11 // pred_fallthru
          _
        // Predicated region
        $region25: #{tpu_custom_call.1} parent=11 // pred_check
          %p300 = pneg %p134
        $region26: #{tpu_custom_call.1} parent=11 // pred_check_branch
          %302 = sbr.rel (%p300) target = $region28
        $region27: #{tpu_custom_call.1} parent=11 // pred_region
          %304 = vsyncadd [#allocation7], 0
          %s305 = sshll.u32 %s4, 4
          %s306 = int_to_ptr.hbm [resolvable:$true] %s305
          %s307 = sshll.u32 [#allocation8], 4
          %s308 = int_to_ptr.vmem [resolvable:$true] %s307
          %313 = dma.hbm_to_vmem [thread:$0]  %s306, 192, %s308, [#allocation7], 64, 64, 4
        $region28: #{tpu_custom_call.1} parent=11 // pred_fallthru
          _
        // Predicated region
        $region29: #{tpu_custom_call.1} parent=11 // pred_check
          %p314 = pneg %p155
        $region30: #{tpu_custom_call.1} parent=11 // pred_check_branch
          %316 = sbr.rel (%p314) target = $region32
        $region31: #{tpu_custom_call.1} parent=11 // pred_region
          _
        $region32: #{tpu_custom_call.1} parent=11 // pred_fallthru
          _
        // Predicated region
        $region33: #{tpu_custom_call.1} parent=11 // pred_check
          %p317 = pneg %p176
        $region34: #{tpu_custom_call.1} parent=11 // pred_check_branch
          %319 = sbr.rel (%p317) target = $region36
        $region35: #{tpu_custom_call.1} parent=11 // pred_region
          _
        $region36: #{tpu_custom_call.1} parent=11 // pred_fallthru
          _
        // Predicated region
        $region37: #{tpu_custom_call.1} parent=11 // pred_check
          %p320 = pneg %p197
        $region38: #{tpu_custom_call.1} parent=11 // pred_check_branch
          %322 = sbr.rel (%p320) target = $region40
        $region39: #{tpu_custom_call.1} parent=11 // pred_region
          %324 = vsyncadd [#allocation10], 0
          %s325 = sshll.u32 %s7, 4
          %s326 = int_to_ptr.hbm [resolvable:$true] %s325
          %s327 = sshll.u32 [#allocation9], 4
          %s328 = int_to_ptr.vmem [resolvable:$true] %s327
          %333 = dma.hbm_to_vmem [thread:$0]  %s326, 1024, %s328, [#allocation10], 64, 64, 4
        $region40: #{tpu_custom_call.1} parent=11 // pred_fallthru
          _
        // Predicated region
        $region41: #{tpu_custom_call.1} parent=11 // pred_check
          %p334 = pneg %p218
        $region42: #{tpu_custom_call.1} parent=11 // pred_check_branch
          %336 = sbr.rel (%p334) target = $region44
        $region43: #{tpu_custom_call.1} parent=11 // pred_region
          _
        $region44: #{tpu_custom_call.1} parent=11 // pred_fallthru
          _
        // Predicated region
        $region45: #{tpu_custom_call.1} parent=11 // pred_check
          %p337 = pneg %p239
        $region46: #{tpu_custom_call.1} parent=11 // pred_check_branch
          %339 = sbr.rel (%p337) target = $region48
        $region47: #{tpu_custom_call.1} parent=11 // pred_region
          _
        $region48: #{tpu_custom_call.1} parent=11 // pred_fallthru
          _
      $region12: #{tpu_custom_call.1} parent=5 // pred_fallthru
        _
      %p340 = scmp.lt.s32.totalorder %s24, 2
      // Predicated region
      $region49: #{tpu_custom_call.1} parent=5 // pred_check
        %p341 = pneg %p340
      $region50: #{tpu_custom_call.1} parent=5 // pred_check_branch
        %343 = sbr.rel (%p341) target = $region52
      $region51: #{tpu_custom_call.1} parent=5 // pred_region
        // Predicated region
        $region53: #{tpu_custom_call.1} parent=51 // pred_check
          %p344 = pneg %p44
        $region54: #{tpu_custom_call.1} parent=51 // pred_check_branch
          %346 = sbr.rel (%p344) target = $region56
        $region55: #{tpu_custom_call.1} parent=51 // pred_region
          %s347 = sand.u32 %s34, 1
          %s348 = scalar_lea.sflag [#allocation4], %s347
          %s349 = sand.u32 %s34, 1
          %s350 = smul.addr %s349, 128
          %s351 = scalar_lea.vmem [#allocation3], %s350
          %353 = vsyncadd %s348, 0
          %s354 = smul.addr %s24, 32
          %s355 = smul.addr %s354, 4
          %s356 = scalar_lea.hbm %s0, %s355
          %s357 = sshll.u32 %s356, 4
          %s358 = int_to_ptr.hbm [resolvable:$true] %s357
          %s359 = sshll.u32 %s351, 4
          %s360 = int_to_ptr.vmem [resolvable:$true] %s359
          %365 = dma.hbm_to_vmem [thread:$0]  %s358, 2048, %s360, %s348, 64, 64, 4
        $region56: #{tpu_custom_call.1} parent=51 // pred_fallthru
          _
      $region52: #{tpu_custom_call.1} parent=5 // pred_fallthru
        _
      %p366 = scmp.le.s32.totalorder 1, %s24
      %p367 = scmp.lt.s32.totalorder %s24, 3
      %p368 = pnand %p366, %p367
      %p369 = pneg %p368
      // Predicated region
      $region57: #{tpu_custom_call.1} parent=5 // pred_check
        _
      $region58: #{tpu_custom_call.1} parent=5 // pred_check_branch
        %371 = sbr.rel (%p368) target = $region60
      $region59: #{tpu_custom_call.1} parent=5 // pred_region
        %s372 = ssub.s32 %s24, 1
        %s373 = sand.u32 %s37, 1
        %s374 = scalar_lea.sflag [#allocation4], %s373
        %s375 = sand.u32 %s37, 1
        %s376 = smul.addr %s375, 128
        %s377 = scalar_lea.vmem [#allocation3], %s376
        // Predicated region
        $region61: #{tpu_custom_call.1} parent=59 // pred_check
          %p378 = pneg %p50
        $region62: #{tpu_custom_call.1} parent=59 // pred_check_branch
          %380 = sbr.rel (%p378) target = $region64
        $region63: #{tpu_custom_call.1} parent=59 // pred_region
          %382 = dma.done %s374, 2048
        $region64: #{tpu_custom_call.1} parent=59 // pred_fallthru
          _
        // Predicated region
        $region65: #{tpu_custom_call.1} parent=59 // pred_check
          %p383 = pneg %p71
        $region66: #{tpu_custom_call.1} parent=59 // pred_check_branch
          %385 = sbr.rel (%p383) target = $region68
        $region67: #{tpu_custom_call.1} parent=59 // pred_region
          %387 = dma.done [#allocation7], 1024
        $region68: #{tpu_custom_call.1} parent=59 // pred_fallthru
          _
        // Predicated region
        $region69: #{tpu_custom_call.1} parent=59 // pred_check
          %p388 = pneg %p134
        $region70: #{tpu_custom_call.1} parent=59 // pred_check_branch
          %390 = sbr.rel (%p388) target = $region72
        $region71: #{tpu_custom_call.1} parent=59 // pred_region
          %392 = dma.done [#allocation7], 192
        $region72: #{tpu_custom_call.1} parent=59 // pred_fallthru
          _
        // Predicated region
        $region73: #{tpu_custom_call.1} parent=59 // pred_check
          %p393 = pneg %p197
        $region74: #{tpu_custom_call.1} parent=59 // pred_check_branch
          %395 = sbr.rel (%p393) target = $region76
        $region75: #{tpu_custom_call.1} parent=59 // pred_region
          %397 = dma.done [#allocation10], 1024
        $region76: #{tpu_custom_call.1} parent=59 // pred_fallthru
          _
        %s398 = sand.u32 %s37, 1
        %s399 = scalar_lea.sflag [#allocation4], %s398
        %s400 = sand.u32 %s37, 1
        %s401 = smul.addr %s400, 128
        %s402 = scalar_lea.vmem [#allocation3], %s401
        %p403 = pneg %p50
        %p404 = pneg %p47
        %p405 = pneg %p71
        %p406 = pneg %p68
        %p407 = pneg %p92
        %p408 = pneg %p89
        %p409 = pneg %p113
        %p410 = pneg %p110
        %p411 = pneg %p134
        %p412 = pneg %p131
        %p413 = pneg %p155
        %p414 = pneg %p152
        %p415 = pneg %p176
        %p416 = pneg %p173
        %p417 = pneg %p197
        %p418 = pneg %p194
        %p419 = pneg %p218
        %p420 = pneg %p215
        %p421 = pneg %p239
        %p422 = pneg %p236
        %p423 = pneg %p265
        %p424 = pneg %p262
        %s425 = sand.u32 %s252, 1
        %s426 = scalar_lea.sflag [#allocation5], %s425
        %s427 = sand.u32 %s252, 1
        %s428 = smul.addr %s427, 256
        %s429 = scalar_lea.vmem [#allocation11], %s428
        %v430 = vld [vmem:[%s377] sm:$0xf]
        %v431 = vld [vmem:[%s377 + $0x4] sm:$0xf]
        %v432 = vld [vmem:[%s377 + $0x8] sm:$0xf]
        %v433 = vld [vmem:[%s377 + $0xc] sm:$0xf]
        %v434 = vld [vmem:[%s377 + $0x10] sm:$0xf]
        %v435 = vld [vmem:[%s377 + $0x14] sm:$0xf]
        %v436 = vld [vmem:[%s377 + $0x18] sm:$0xf]
        %v437 = vld [vmem:[%s377 + $0x1c] sm:$0xf]
        %v438 = vld [vmem:[%s377 + $0x20] sm:$0xf]
        %v439 = vld [vmem:[%s377 + $0x24] sm:$0xf]
        %v440 = vld [vmem:[%s377 + $0x28] sm:$0xf]
        %v441 = vld [vmem:[%s377 + $0x2c] sm:$0xf]
        %v442 = vld [vmem:[%s377 + $0x30] sm:$0xf]
        %v443 = vld [vmem:[%s377 + $0x34] sm:$0xf]
        %v444 = vld [vmem:[%s377 + $0x38] sm:$0xf]
        %v445 = vld [vmem:[%s377 + $0x3c] sm:$0xf]
        %v446 = vld [vmem:[%s377 + $0x40] sm:$0xf]
        %v447 = vld [vmem:[%s377 + $0x44] sm:$0xf]
        %v448 = vld [vmem:[%s377 + $0x48] sm:$0xf]
        %v449 = vld [vmem:[%s377 + $0x4c] sm:$0xf]
        %v450 = vld [vmem:[%s377 + $0x50] sm:$0xf]
        %v451 = vld [vmem:[%s377 + $0x54] sm:$0xf]
        %v452 = vld [vmem:[%s377 + $0x58] sm:$0xf]
        %v453 = vld [vmem:[%s377 + $0x5c] sm:$0xf]
        %v454 = vld [vmem:[%s377 + $0x60] sm:$0xf]
        %v455 = vld [vmem:[%s377 + $0x64] sm:$0xf]
        %v456 = vld [vmem:[%s377 + $0x68] sm:$0xf]
        %v457 = vld [vmem:[%s377 + $0x6c] sm:$0xf]
        %v458 = vld [vmem:[%s377 + $0x70] sm:$0xf]
        %v459 = vld [vmem:[%s377 + $0x74] sm:$0xf]
        %v460 = vld [vmem:[%s377 + $0x78] sm:$0xf]
        %v461 = vld [vmem:[%s377 + $0x7c] sm:$0xf]
        %v462 = vld [vmem:[#allocation6] sm:$0xf]
        %v463 = vld [vmem:[#allocation6 + $0x4] sm:$0xf]
        %v464 = vld [vmem:[#allocation6 + $0x8] sm:$0xf]
        %v465 = vld [vmem:[#allocation6 + $0xc] sm:$0xf]
        %v466 = vld [vmem:[#allocation6 + $0x10] sm:$0xf]
        %v467 = vld [vmem:[#allocation6 + $0x14] sm:$0xf]
        %v468 = vld [vmem:[#allocation6 + $0x18] sm:$0xf]
        %v469 = vld [vmem:[#allocation6 + $0x1c] sm:$0xf]
        %v470 = vld [vmem:[#allocation6 + $0x20] sm:$0xf]
        %v471 = vld [vmem:[#allocation6 + $0x24] sm:$0xf]
        %v472 = vld [vmem:[#allocation6 + $0x28] sm:$0xf]
        %v473 = vld [vmem:[#allocation6 + $0x2c] sm:$0xf]
        %v474 = vld [vmem:[#allocation6 + $0x30] sm:$0xf]
        %v475 = vld [vmem:[#allocation6 + $0x34] sm:$0xf]
        %v476 = vld [vmem:[#allocation6 + $0x38] sm:$0xf]
        %v477 = vld [vmem:[#allocation6 + $0x3c] sm:$0xf]
        %v510 = vunpack.c.l.b16 %v430
        %v511 = vunpack.c.l.b16 %v431
        %v512 = vunpack.c.l.b16 %v432
        %v513 = vunpack.c.l.b16 %v433
        %v514 = vunpack.c.l.b16 %v434
        %v515 = vunpack.c.l.b16 %v435
        %v516 = vunpack.c.l.b16 %v436
        %v517 = vunpack.c.l.b16 %v437
        %v518 = vunpack.c.l.b16 %v438
        %v519 = vunpack.c.l.b16 %v439
        %v520 = vunpack.c.l.b16 %v440
        %v521 = vunpack.c.l.b16 %v441
        %v522 = vunpack.c.l.b16 %v442
        %v523 = vunpack.c.l.b16 %v443
        %v524 = vunpack.c.l.b16 %v444
        %v525 = vunpack.c.l.b16 %v445
        %v526 = vunpack.c.l.b16 %v446
        %v527 = vunpack.c.l.b16 %v447
        %v528 = vunpack.c.l.b16 %v448
        %v529 = vunpack.c.l.b16 %v449
        %v530 = vunpack.c.l.b16 %v450
        %v531 = vunpack.c.l.b16 %v451
        %v532 = vunpack.c.l.b16 %v452
        %v533 = vunpack.c.l.b16 %v453
        %v534 = vunpack.c.l.b16 %v454
        %v535 = vunpack.c.l.b16 %v455
        %v536 = vunpack.c.l.b16 %v456
        %v537 = vunpack.c.l.b16 %v457
        %v538 = vunpack.c.l.b16 %v458
        %v539 = vunpack.c.l.b16 %v459
        %v540 = vunpack.c.l.b16 %v460
        %v541 = vunpack.c.l.b16 %v461
        %v542 = vpack.c.b16 %v511, %v510
        %v543 = vpack.c.b16 %v513, %v512
        %v544 = vpack.c.b16 %v515, %v514
        %v545 = vpack.c.b16 %v517, %v516
        %v546 = vpack.c.b16 %v519, %v518
        %v547 = vpack.c.b16 %v521, %v520
        %v548 = vpack.c.b16 %v523, %v522
        %v549 = vpack.c.b16 %v525, %v524
        %v550 = vpack.c.b16 %v527, %v526
        %v551 = vpack.c.b16 %v529, %v528
        %v552 = vpack.c.b16 %v531, %v530
        %v553 = vpack.c.b16 %v533, %v532
        %v554 = vpack.c.b16 %v535, %v534
        %v555 = vpack.c.b16 %v537, %v536
        %v556 = vpack.c.b16 %v539, %v538
        %v557 = vpack.c.b16 %v541, %v540
        %v590 = vunpack.c.l.b16 %v462
        %v591 = vunpack.c.l.b16 %v463
        %v592 = vunpack.c.l.b16 %v464
        %v593 = vunpack.c.l.b16 %v465
        %v594 = vunpack.c.l.b16 %v466
        %v595 = vunpack.c.l.b16 %v467
        %v596 = vunpack.c.l.b16 %v468
        %v597 = vunpack.c.l.b16 %v469
        %v598 = vunpack.c.l.b16 %v470
        %v599 = vunpack.c.l.b16 %v471
        %v600 = vunpack.c.l.b16 %v472
        %v601 = vunpack.c.l.b16 %v473
        %v602 = vunpack.c.l.b16 %v474
        %v603 = vunpack.c.l.b16 %v475
        %v604 = vunpack.c.l.b16 %v476
        %v605 = vunpack.c.l.b16 %v477
        %v606 = vpack.c.b16 %v591, %v590
        %v607 = vpack.c.b16 %v593, %v592
        %v608 = vpack.c.b16 %v595, %v594
        %v609 = vpack.c.b16 %v597, %v596
        %v610 = vpack.c.b16 %v599, %v598
        %v611 = vpack.c.b16 %v601, %v600
        %v612 = vpack.c.b16 %v603, %v602
        %v613 = vpack.c.b16 %v605, %v604
        %622 = vmatpush.bf16.msra.mxu0 %v613
        %623 = vmatpush.bf16.msra.mxu0 %v612
        %624 = vmatpush.bf16.msra.mxu0 %v611
        %625 = vmatpush.bf16.msra.mxu0 %v610
        %626 = vmatpush.bf16.msra.mxu0 %v609
        %627 = vmatpush.bf16.msra.mxu0 %v608
        %628 = vmatpush.bf16.msra.mxu0 %v607
        %629 = vmatpush.bf16.msra.mxu0 %v606
        %630 = vmatmul.bf16.gmra.mxu0 %v542
        %v631 = vpop.f32.mrf.mxu0
        %v632 = vadd.f32 0.0, %v631
        %v633 = vpop.f32.mrf.mxu0
        %v634 = vadd.f32 0.0, %v633
        %635 = vmatmul.bf16.gmra.mxu0 %v543
        %v636 = vpop.f32.mrf.mxu0
        %v637 = vadd.f32 0.0, %v636
        %v638 = vpop.f32.mrf.mxu0
        %v639 = vadd.f32 0.0, %v638
        %640 = vmatmul.bf16.gmra.mxu0 %v544
        %v641 = vpop.f32.mrf.mxu0
        %v642 = vadd.f32 0.0, %v641
        %v643 = vpop.f32.mrf.mxu0
        %v644 = vadd.f32 0.0, %v643
        %645 = vmatmul.bf16.gmra.mxu0 %v545
        %v646 = vpop.f32.mrf.mxu0
        %v647 = vadd.f32 0.0, %v646
        %v648 = vpop.f32.mrf.mxu0
        %v649 = vadd.f32 0.0, %v648
        %650 = vmatmul.bf16.gmra.mxu0 %v546
        %v651 = vpop.f32.mrf.mxu0
        %v652 = vadd.f32 0.0, %v651
        %v653 = vpop.f32.mrf.mxu0
        %v654 = vadd.f32 0.0, %v653
        %655 = vmatmul.bf16.gmra.mxu0 %v547
        %v656 = vpop.f32.mrf.mxu0
        %v657 = vadd.f32 0.0, %v656
        %v658 = vpop.f32.mrf.mxu0
        %v659 = vadd.f32 0.0, %v658
        %660 = vmatmul.bf16.gmra.mxu0 %v548
        %v661 = vpop.f32.mrf.mxu0
        %v662 = vadd.f32 0.0, %v661
        %v663 = vpop.f32.mrf.mxu0
        %v664 = vadd.f32 0.0, %v663
        %665 = vmatmul.bf16.gmra.mxu0 %v549
        %v666 = vpop.f32.mrf.mxu0
        %v667 = vadd.f32 0.0, %v666
        %v668 = vpop.f32.mrf.mxu0
        %v669 = vadd.f32 0.0, %v668
        %670 = vmatmul.bf16.gmra.mxu0 %v550
        %v671 = vpop.f32.mrf.mxu0
        %v672 = vadd.f32 0.0, %v671
        %v673 = vpop.f32.mrf.mxu0
        %v674 = vadd.f32 0.0, %v673
        %675 = vmatmul.bf16.gmra.mxu0 %v551
        %v676 = vpop.f32.mrf.mxu0
        %v677 = vadd.f32 0.0, %v676
        %v678 = vpop.f32.mrf.mxu0
        %v679 = vadd.f32 0.0, %v678
        %680 = vmatmul.bf16.gmra.mxu0 %v552
        %v681 = vpop.f32.mrf.mxu0
        %v682 = vadd.f32 0.0, %v681
        %v683 = vpop.f32.mrf.mxu0
        %v684 = vadd.f32 0.0, %v683
        %685 = vmatmul.bf16.gmra.mxu0 %v553
        %v686 = vpop.f32.mrf.mxu0
        %v687 = vadd.f32 0.0, %v686
        %v688 = vpop.f32.mrf.mxu0
        %v689 = vadd.f32 0.0, %v688
        %690 = vmatmul.bf16.gmra.mxu0 %v554
        %v691 = vpop.f32.mrf.mxu0
        %v692 = vadd.f32 0.0, %v691
        %v693 = vpop.f32.mrf.mxu0
        %v694 = vadd.f32 0.0, %v693
        %695 = vmatmul.bf16.gmra.mxu0 %v555
        %v696 = vpop.f32.mrf.mxu0
        %v697 = vadd.f32 0.0, %v696
        %v698 = vpop.f32.mrf.mxu0
        %v699 = vadd.f32 0.0, %v698
        %700 = vmatmul.bf16.gmra.mxu0 %v556
        %v701 = vpop.f32.mrf.mxu0
        %v702 = vadd.f32 0.0, %v701
        %v703 = vpop.f32.mrf.mxu0
        %v704 = vadd.f32 0.0, %v703
        %705 = vmatmul.bf16.gmra.mxu0 %v557
        %v706 = vpop.f32.mrf.mxu0
        %v707 = vadd.f32 0.0, %v706
        %v708 = vpop.f32.mrf.mxu0
        %v709 = vadd.f32 0.0, %v708
        %710 = vdwg.mxu0
        %v711 = vld [vmem:[%s2] sm:$0x1]
        %v713 = vperm.slane %v711, 0
        %v715 = vmul.f32 %v632, %v713
        %v716 = vmul.f32 %v634, %v713
        %v717 = vmul.f32 %v637, %v713
        %v718 = vmul.f32 %v639, %v713
        %v719 = vmul.f32 %v642, %v713
        %v720 = vmul.f32 %v644, %v713
        %v721 = vmul.f32 %v647, %v713
        %v722 = vmul.f32 %v649, %v713
        %v723 = vmul.f32 %v652, %v713
        %v724 = vmul.f32 %v654, %v713
        %v725 = vmul.f32 %v657, %v713
        %v726 = vmul.f32 %v659, %v713
        %v727 = vmul.f32 %v662, %v713
        %v728 = vmul.f32 %v664, %v713
        %v729 = vmul.f32 %v667, %v713
        %v730 = vmul.f32 %v669, %v713
        %v731 = vmul.f32 %v672, %v713
        %v732 = vmul.f32 %v674, %v713
        %v733 = vmul.f32 %v677, %v713
        %v734 = vmul.f32 %v679, %v713
        %v735 = vmul.f32 %v682, %v713
        %v736 = vmul.f32 %v684, %v713
        %v737 = vmul.f32 %v687, %v713
        %v738 = vmul.f32 %v689, %v713
        %v739 = vmul.f32 %v692, %v713
        %v740 = vmul.f32 %v694, %v713
        %v741 = vmul.f32 %v697, %v713
        %v742 = vmul.f32 %v699, %v713
        %v743 = vmul.f32 %v702, %v713
        %v744 = vmul.f32 %v704, %v713
        %v745 = vmul.f32 %v707, %v713
        %v746 = vmul.f32 %v709, %v713
        %v747 = vld [vmem:[%s3] sm:$0x1]
        %v749 = vperm.slane %v747, 0
        %v751 = vadd.f32 %v715, %v749
        %v752 = vadd.f32 %v716, %v749
        %v753 = vadd.f32 %v717, %v749
        %v754 = vadd.f32 %v718, %v749
        %v755 = vadd.f32 %v719, %v749
        %v756 = vadd.f32 %v720, %v749
        %v757 = vadd.f32 %v721, %v749
        %v758 = vadd.f32 %v722, %v749
        %v759 = vadd.f32 %v723, %v749
        %v760 = vadd.f32 %v724, %v749
        %v761 = vadd.f32 %v725, %v749
        %v762 = vadd.f32 %v726, %v749
        %v763 = vadd.f32 %v727, %v749
        %v764 = vadd.f32 %v728, %v749
        %v765 = vadd.f32 %v729, %v749
        %v766 = vadd.f32 %v730, %v749
        %v767 = vadd.f32 %v731, %v749
        %v768 = vadd.f32 %v732, %v749
        %v769 = vadd.f32 %v733, %v749
        %v770 = vadd.f32 %v734, %v749
        %v771 = vadd.f32 %v735, %v749
        %v772 = vadd.f32 %v736, %v749
        %v773 = vadd.f32 %v737, %v749
        %v774 = vadd.f32 %v738, %v749
        %v775 = vadd.f32 %v739, %v749
        %v776 = vadd.f32 %v740, %v749
        %v777 = vadd.f32 %v741, %v749
        %v778 = vadd.f32 %v742, %v749
        %v779 = vadd.f32 %v743, %v749
        %v780 = vadd.f32 %v744, %v749
        %v781 = vadd.f32 %v745, %v749
        %v782 = vadd.f32 %v746, %v749
        %v783 = vmax.f32 %v751, 0.0
        %v784 = vmax.f32 %v752, 0.0
        %v785 = vmax.f32 %v753, 0.0
        %v786 = vmax.f32 %v754, 0.0
        %v787 = vmax.f32 %v755, 0.0
        %v788 = vmax.f32 %v756, 0.0
        %v789 = vmax.f32 %v757, 0.0
        %v790 = vmax.f32 %v758, 0.0
        %v791 = vmax.f32 %v759, 0.0
        %v792 = vmax.f32 %v760, 0.0
        %v793 = vmax.f32 %v761, 0.0
        %v794 = vmax.f32 %v762, 0.0
        %v795 = vmax.f32 %v763, 0.0
        %v796 = vmax.f32 %v764, 0.0
        %v797 = vmax.f32 %v765, 0.0
        %v798 = vmax.f32 %v766, 0.0
        %v799 = vmax.f32 %v767, 0.0
        %v800 = vmax.f32 %v768, 0.0
        %v801 = vmax.f32 %v769, 0.0
        %v802 = vmax.f32 %v770, 0.0
        %v803 = vmax.f32 %v771, 0.0
        %v804 = vmax.f32 %v772, 0.0
        %v805 = vmax.f32 %v773, 0.0
        %v806 = vmax.f32 %v774, 0.0
        %v807 = vmax.f32 %v775, 0.0
        %v808 = vmax.f32 %v776, 0.0
        %v809 = vmax.f32 %v777, 0.0
        %v810 = vmax.f32 %v778, 0.0
        %v811 = vmax.f32 %v779, 0.0
        %v812 = vmax.f32 %v780, 0.0
        %v813 = vmax.f32 %v781, 0.0
        %v814 = vmax.f32 %v782, 0.0
        %v815 = vld [vmem:[#allocation8] sm:$0x7]
        %v816 = vld [vmem:[#allocation8 + $0x4] sm:$0x7]
        %v817 = vld [vmem:[#allocation8 + $0x8] sm:$0x7]
        %818 = vst [vmem:[#allocation2] sm:$0xff] 0.0
        %819 = vst [vmem:[#allocation2 + $0x8] sm:$0xff] 0.0
        %820 = vst [vmem:[#allocation2 + $0x10] sm:$0xff] 0.0
        %821 = vst [vmem:[#allocation2 + $0x18] sm:$0xff] 0.0
        %s822 = scalar_lea.vmem [#allocation2], 544
        %823 = vst [vmem:[%s822] sm:$0xff] 0.0
        %824 = vst [vmem:[%s822 + $0x8] sm:$0xff] 0.0
        %825 = vst [vmem:[%s822 + $0x10] sm:$0xff] 0.0
        %826 = vst [vmem:[%s822 + $0x18] sm:$0xff] 0.0
        %s827 = scalar_lea.vmem [#allocation2], 32
        %828 = vst [vmem:[%s827 + $0x7] sm:$0x1] 0.0
        %829 = vst [vmem:[%s827 + $0x27] sm:$0x1] 0.0
        %830 = vst [vmem:[%s827 + $0x47] sm:$0x1] 0.0
        %831 = vst [vmem:[%s827 + $0x67] sm:$0x1] 0.0
        %832 = vst [vmem:[%s827 + $0x87] sm:$0x1] 0.0
        %833 = vst [vmem:[%s827 + $0xa7] sm:$0x1] 0.0
        %834 = vst [vmem:[%s827 + $0xc7] sm:$0x1] 0.0
        %835 = vst [vmem:[%s827 + $0xe7] sm:$0x1] 0.0
        %836 = vst [vmem:[%s827 + $0x107] sm:$0x1] 0.0
        %837 = vst [vmem:[%s827 + $0x127] sm:$0x1] 0.0
        %838 = vst [vmem:[%s827 + $0x147] sm:$0x1] 0.0
        %839 = vst [vmem:[%s827 + $0x167] sm:$0x1] 0.0
        %840 = vst [vmem:[%s827 + $0x187] sm:$0x1] 0.0
        %841 = vst [vmem:[%s827 + $0x1a7] sm:$0x1] 0.0
        %842 = vst [vmem:[%s827 + $0x1c7] sm:$0x1] 0.0
        %843 = vst [vmem:[%s827 + $0x1e7] sm:$0x1] 0.0
        %844 = vst [vmem:[%s827 + $0x18] sm:$0x1] 0.0
        %845 = vst [vmem:[%s827 + $0x38] sm:$0x1] 0.0
        %846 = vst [vmem:[%s827 + $0x58] sm:$0x1] 0.0
        %847 = vst [vmem:[%s827 + $0x78] sm:$0x1] 0.0
        %848 = vst [vmem:[%s827 + $0x98] sm:$0x1] 0.0
        %849 = vst [vmem:[%s827 + $0xb8] sm:$0x1] 0.0
        %850 = vst [vmem:[%s827 + $0xd8] sm:$0x1] 0.0
        %851 = vst [vmem:[%s827 + $0xf8] sm:$0x1] 0.0
        %852 = vst [vmem:[%s827 + $0x118] sm:$0x1] 0.0
        %853 = vst [vmem:[%s827 + $0x138] sm:$0x1] 0.0
        %854 = vst [vmem:[%s827 + $0x158] sm:$0x1] 0.0
        %855 = vst [vmem:[%s827 + $0x178] sm:$0x1] 0.0
        %856 = vst [vmem:[%s827 + $0x198] sm:$0x1] 0.0
        %857 = vst [vmem:[%s827 + $0x1b8] sm:$0x1] 0.0
        %858 = vst [vmem:[%s827 + $0x1d8] sm:$0x1] 0.0
        %859 = vst [vmem:[%s827 + $0x1f8] sm:$0x1] 0.0
        %860 = vst [vmem:[%s827 + $0x8] sm:$0xff] %v783
        %861 = vst [vmem:[%s827 + $0x10] sm:$0xff] %v784
        %862 = vst [vmem:[%s827 + $0x28] sm:$0xff] %v785
        %863 = vst [vmem:[%s827 + $0x30] sm:$0xff] %v786
        %864 = vst [vmem:[%s827 + $0x48] sm:$0xff] %v787
        %865 = vst [vmem:[%s827 + $0x50] sm:$0xff] %v788
        %866 = vst [vmem:[%s827 + $0x68] sm:$0xff] %v789
        %867 = vst [vmem:[%s827 + $0x70] sm:$0xff] %v790
        %868 = vst [vmem:[%s827 + $0x88] sm:$0xff] %v791
        %869 = vst [vmem:[%s827 + $0x90] sm:$0xff] %v792
        %870 = vst [vmem:[%s827 + $0xa8] sm:$0xff] %v793
        %871 = vst [vmem:[%s827 + $0xb0] sm:$0xff] %v794
        %872 = vst [vmem:[%s827 + $0xc8] sm:$0xff] %v795
        %873 = vst [vmem:[%s827 + $0xd0] sm:$0xff] %v796
        %874 = vst [vmem:[%s827 + $0xe8] sm:$0xff] %v797
        %875 = vst [vmem:[%s827 + $0xf0] sm:$0xff] %v798
        %876 = vst [vmem:[%s827 + $0x108] sm:$0xff] %v799
        %877 = vst [vmem:[%s827 + $0x110] sm:$0xff] %v800
        %878 = vst [vmem:[%s827 + $0x128] sm:$0xff] %v801
        %879 = vst [vmem:[%s827 + $0x130] sm:$0xff] %v802
        %880 = vst [vmem:[%s827 + $0x148] sm:$0xff] %v803
        %881 = vst [vmem:[%s827 + $0x150] sm:$0xff] %v804
        %882 = vst [vmem:[%s827 + $0x168] sm:$0xff] %v805
        %883 = vst [vmem:[%s827 + $0x170] sm:$0xff] %v806
        %884 = vst [vmem:[%s827 + $0x188] sm:$0xff] %v807
        %885 = vst [vmem:[%s827 + $0x190] sm:$0xff] %v808
        %886 = vst [vmem:[%s827 + $0x1a8] sm:$0xff] %v809
        %887 = vst [vmem:[%s827 + $0x1b0] sm:$0xff] %v810
        %888 = vst [vmem:[%s827 + $0x1c8] sm:$0xff] %v811
        %889 = vst [vmem:[%s827 + $0x1d0] sm:$0xff] %v812
        %890 = vst [vmem:[%s827 + $0x1e8] sm:$0xff] %v813
        %891 = vst [vmem:[%s827 + $0x1f0] sm:$0xff] %v814
        %v892 = vld [vmem:[#allocation2 + $0x7] sm:$0xff]
        %v893 = vld [vmem:[#allocation2 + $0xf] sm:$0xff]
        %v894 = vld [vmem:[#allocation2 + $0x27] sm:$0xff]
        %v895 = vld [vmem:[#allocation2 + $0x2f] sm:$0xff]
        %v896 = vld [vmem:[#allocation2 + $0x47] sm:$0xff]
        %v897 = vld [vmem:[#allocation2 + $0x4f] sm:$0xff]
        %v898 = vld [vmem:[#allocation2 + $0x67] sm:$0xff]
        %v899 = vld [vmem:[#allocation2 + $0x6f] sm:$0xff]
        %v900 = vld [vmem:[#allocation2 + $0x87] sm:$0xff]
        %v901 = vld [vmem:[#allocation2 + $0x8f] sm:$0xff]
        %v902 = vld [vmem:[#allocation2 + $0xa7] sm:$0xff]
        %v903 = vld [vmem:[#allocation2 + $0xaf] sm:$0xff]
        %v904 = vld [vmem:[#allocation2 + $0xc7] sm:$0xff]
        %v905 = vld [vmem:[#allocation2 + $0xcf] sm:$0xff]
        %v906 = vld [vmem:[#allocation2 + $0xe7] sm:$0xff]
        %v907 = vld [vmem:[#allocation2 + $0xef] sm:$0xff]
        %v908 = vld [vmem:[#allocation2 + $0x107] sm:$0xff]
        %v909 = vld [vmem:[#allocation2 + $0x10f] sm:$0xff]
        %v910 = vld [vmem:[#allocation2 + $0x127] sm:$0xff]
        %v911 = vld [vmem:[#allocation2 + $0x12f] sm:$0xff]
        %v912 = vld [vmem:[#allocation2 + $0x147] sm:$0xff]
        %v913 = vld [vmem:[#allocation2 + $0x14f] sm:$0xff]
        %v914 = vld [vmem:[#allocation2 + $0x167] sm:$0xff]
        %v915 = vld [vmem:[#allocation2 + $0x16f] sm:$0xff]
        %v916 = vld [vmem:[#allocation2 + $0x187] sm:$0xff]
        %v917 = vld [vmem:[#allocation2 + $0x18f] sm:$0xff]
        %v918 = vld [vmem:[#allocation2 + $0x1a7] sm:$0xff]
        %v919 = vld [vmem:[#allocation2 + $0x1af] sm:$0xff]
        %v920 = vld [vmem:[#allocation2 + $0x1c7] sm:$0xff]
        %v921 = vld [vmem:[#allocation2 + $0x1cf] sm:$0xff]
        %v922 = vld [vmem:[#allocation2 + $0x1e7] sm:$0xff]
        %v923 = vld [vmem:[#allocation2 + $0x1ef] sm:$0xff]
        %v924 = vperm.slane %v815, 0
        %v925 = vmul.f32 %v892, %v924
        %v926 = vmul.f32 %v893, %v924
        %v927 = vmul.f32 %v894, %v924
        %v928 = vmul.f32 %v895, %v924
        %v929 = vmul.f32 %v896, %v924
        %v930 = vmul.f32 %v897, %v924
        %v931 = vmul.f32 %v898, %v924
        %v932 = vmul.f32 %v899, %v924
        %v933 = vmul.f32 %v900, %v924
        %v934 = vmul.f32 %v901, %v924
        %v935 = vmul.f32 %v902, %v924
        %v936 = vmul.f32 %v903, %v924
        %v937 = vmul.f32 %v904, %v924
        %v938 = vmul.f32 %v905, %v924
        %v939 = vmul.f32 %v906, %v924
        %v940 = vmul.f32 %v907, %v924
        %v941 = vmul.f32 %v908, %v924
        %v942 = vmul.f32 %v909, %v924
        %v943 = vmul.f32 %v910, %v924
        %v944 = vmul.f32 %v911, %v924
        %v945 = vmul.f32 %v912, %v924
        %v946 = vmul.f32 %v913, %v924
        %v947 = vmul.f32 %v914, %v924
        %v948 = vmul.f32 %v915, %v924
        %v949 = vmul.f32 %v916, %v924
        %v950 = vmul.f32 %v917, %v924
        %v951 = vmul.f32 %v918, %v924
        %v952 = vmul.f32 %v919, %v924
        %v953 = vmul.f32 %v920, %v924
        %v954 = vmul.f32 %v921, %v924
        %v955 = vmul.f32 %v922, %v924
        %v956 = vmul.f32 %v923, %v924
        %v957 = vadd.f32 %v925, 0.0
        %v958 = vadd.f32 %v926, 0.0
        %v959 = vadd.f32 %v927, 0.0
        %v960 = vadd.f32 %v928, 0.0
        %v961 = vadd.f32 %v929, 0.0
        %v962 = vadd.f32 %v930, 0.0
        %v963 = vadd.f32 %v931, 0.0
        %v964 = vadd.f32 %v932, 0.0
        %v965 = vadd.f32 %v933, 0.0
        %v966 = vadd.f32 %v934, 0.0
        %v967 = vadd.f32 %v935, 0.0
        %v968 = vadd.f32 %v936, 0.0
        %v969 = vadd.f32 %v937, 0.0
        %v970 = vadd.f32 %v938, 0.0
        %v971 = vadd.f32 %v939, 0.0
        %v972 = vadd.f32 %v940, 0.0
        %v973 = vadd.f32 %v941, 0.0
        %v974 = vadd.f32 %v942, 0.0
        %v975 = vadd.f32 %v943, 0.0
        %v976 = vadd.f32 %v944, 0.0
        %v977 = vadd.f32 %v945, 0.0
        %v978 = vadd.f32 %v946, 0.0
        %v979 = vadd.f32 %v947, 0.0
        %v980 = vadd.f32 %v948, 0.0
        %v981 = vadd.f32 %v949, 0.0
        %v982 = vadd.f32 %v950, 0.0
        %v983 = vadd.f32 %v951, 0.0
        %v984 = vadd.f32 %v952, 0.0
        %v985 = vadd.f32 %v953, 0.0
        %v986 = vadd.f32 %v954, 0.0
        %v987 = vadd.f32 %v955, 0.0
        %v988 = vadd.f32 %v956, 0.0
        %v989 = vld [vmem:[#allocation2 + $0x8] sm:$0xff]
        %v990 = vld [vmem:[#allocation2 + $0x10] sm:$0xff]
        %v991 = vld [vmem:[#allocation2 + $0x28] sm:$0xff]
        %v992 = vld [vmem:[#allocation2 + $0x30] sm:$0xff]
        %v993 = vld [vmem:[#allocation2 + $0x48] sm:$0xff]
        %v994 = vld [vmem:[#allocation2 + $0x50] sm:$0xff]
        %v995 = vld [vmem:[#allocation2 + $0x68] sm:$0xff]
        %v996 = vld [vmem:[#allocation2 + $0x70] sm:$0xff]
        %v997 = vld [vmem:[#allocation2 + $0x88] sm:$0xff]
        %v998 = vld [vmem:[#allocation2 + $0x90] sm:$0xff]
        %v999 = vld [vmem:[#allocation2 + $0xa8] sm:$0xff]
        %v1000 = vld [vmem:[#allocation2 + $0xb0] sm:$0xff]
        %v1001 = vld [vmem:[#allocation2 + $0xc8] sm:$0xff]
        %v1002 = vld [vmem:[#allocation2 + $0xd0] sm:$0xff]
        %v1003 = vld [vmem:[#allocation2 + $0xe8] sm:$0xff]
        %v1004 = vld [vmem:[#allocation2 + $0xf0] sm:$0xff]
        %v1005 = vld [vmem:[#allocation2 + $0x108] sm:$0xff]
        %v1006 = vld [vmem:[#allocation2 + $0x110] sm:$0xff]
        %v1007 = vld [vmem:[#allocation2 + $0x128] sm:$0xff]
        %v1008 = vld [vmem:[#allocation2 + $0x130] sm:$0xff]
        %v1009 = vld [vmem:[#allocation2 + $0x148] sm:$0xff]
        %v1010 = vld [vmem:[#allocation2 + $0x150] sm:$0xff]
        %v1011 = vld [vmem:[#allocation2 + $0x168] sm:$0xff]
        %v1012 = vld [vmem:[#allocation2 + $0x170] sm:$0xff]
        %v1013 = vld [vmem:[#allocation2 + $0x188] sm:$0xff]
        %v1014 = vld [vmem:[#allocation2 + $0x190] sm:$0xff]
        %v1015 = vld [vmem:[#allocation2 + $0x1a8] sm:$0xff]
        %v1016 = vld [vmem:[#allocation2 + $0x1b0] sm:$0xff]
        %v1017 = vld [vmem:[#allocation2 + $0x1c8] sm:$0xff]
        %v1018 = vld [vmem:[#allocation2 + $0x1d0] sm:$0xff]
        %v1019 = vld [vmem:[#allocation2 + $0x1e8] sm:$0xff]
        %v1020 = vld [vmem:[#allocation2 + $0x1f0] sm:$0xff]
        %v1021 = vperm.slane %v815, 1
        %v1022 = vmul.f32 %v989, %v1021
        %v1023 = vmul.f32 %v990, %v1021
        %v1024 = vmul.f32 %v991, %v1021
        %v1025 = vmul.f32 %v992, %v1021
        %v1026 = vmul.f32 %v993, %v1021
        %v1027 = vmul.f32 %v994, %v1021
        %v1028 = vmul.f32 %v995, %v1021
        %v1029 = vmul.f32 %v996, %v1021
        %v1030 = vmul.f32 %v997, %v1021
        %v1031 = vmul.f32 %v998, %v1021
        %v1032 = vmul.f32 %v999, %v1021
        %v1033 = vmul.f32 %v1000, %v1021
        %v1034 = vmul.f32 %v1001, %v1021
        %v1035 = vmul.f32 %v1002, %v1021
        %v1036 = vmul.f32 %v1003, %v1021
        %v1037 = vmul.f32 %v1004, %v1021
        %v1038 = vmul.f32 %v1005, %v1021
        %v1039 = vmul.f32 %v1006, %v1021
        %v1040 = vmul.f32 %v1007, %v1021
        %v1041 = vmul.f32 %v1008, %v1021
        %v1042 = vmul.f32 %v1009, %v1021
        %v1043 = vmul.f32 %v1010, %v1021
        %v1044 = vmul.f32 %v1011, %v1021
        %v1045 = vmul.f32 %v1012, %v1021
        %v1046 = vmul.f32 %v1013, %v1021
        %v1047 = vmul.f32 %v1014, %v1021
        %v1048 = vmul.f32 %v1015, %v1021
        %v1049 = vmul.f32 %v1016, %v1021
        %v1050 = vmul.f32 %v1017, %v1021
        %v1051 = vmul.f32 %v1018, %v1021
        %v1052 = vmul.f32 %v1019, %v1021
        %v1053 = vmul.f32 %v1020, %v1021
        %v1054 = vadd.f32 %v957, %v1022
        %v1055 = vadd.f32 %v958, %v1023
        %v1056 = vadd.f32 %v959, %v1024
        %v1057 = vadd.f32 %v960, %v1025
        %v1058 = vadd.f32 %v961, %v1026
        %v1059 = vadd.f32 %v962, %v1027
        %v1060 = vadd.f32 %v963, %v1028
        %v1061 = vadd.f32 %v964, %v1029
        %v1062 = vadd.f32 %v965, %v1030
        %v1063 = vadd.f32 %v966, %v1031
        %v1064 = vadd.f32 %v967, %v1032
        %v1065 = vadd.f32 %v968, %v1033
        %v1066 = vadd.f32 %v969, %v1034
        %v1067 = vadd.f32 %v970, %v1035
        %v1068 = vadd.f32 %v971, %v1036
        %v1069 = vadd.f32 %v972, %v1037
        %v1070 = vadd.f32 %v973, %v1038
        %v1071 = vadd.f32 %v974, %v1039
        %v1072 = vadd.f32 %v975, %v1040
        %v1073 = vadd.f32 %v976, %v1041
        %v1074 = vadd.f32 %v977, %v1042
        %v1075 = vadd.f32 %v978, %v1043
        %v1076 = vadd.f32 %v979, %v1044
        %v1077 = vadd.f32 %v980, %v1045
        %v1078 = vadd.f32 %v981, %v1046
        %v1079 = vadd.f32 %v982, %v1047
        %v1080 = vadd.f32 %v983, %v1048
        %v1081 = vadd.f32 %v984, %v1049
        %v1082 = vadd.f32 %v985, %v1050
        %v1083 = vadd.f32 %v986, %v1051
        %v1084 = vadd.f32 %v987, %v1052
        %v1085 = vadd.f32 %v988, %v1053
        %v1086 = vld [vmem:[#allocation2 + $0x9] sm:$0xff]
        %v1087 = vld [vmem:[#allocation2 + $0x11] sm:$0xff]
        %v1088 = vld [vmem:[#allocation2 + $0x29] sm:$0xff]
        %v1089 = vld [vmem:[#allocation2 + $0x31] sm:$0xff]
        %v1090 = vld [vmem:[#allocation2 + $0x49] sm:$0xff]
        %v1091 = vld [vmem:[#allocation2 + $0x51] sm:$0xff]
        %v1092 = vld [vmem:[#allocation2 + $0x69] sm:$0xff]
        %v1093 = vld [vmem:[#allocation2 + $0x71] sm:$0xff]
        %v1094 = vld [vmem:[#allocation2 + $0x89] sm:$0xff]
        %v1095 = vld [vmem:[#allocation2 + $0x91] sm:$0xff]
        %v1096 = vld [vmem:[#allocation2 + $0xa9] sm:$0xff]
        %v1097 = vld [vmem:[#allocation2 + $0xb1] sm:$0xff]
        %v1098 = vld [vmem:[#allocation2 + $0xc9] sm:$0xff]
        %v1099 = vld [vmem:[#allocation2 + $0xd1] sm:$0xff]
        %v1100 = vld [vmem:[#allocation2 + $0xe9] sm:$0xff]
        %v1101 = vld [vmem:[#allocation2 + $0xf1] sm:$0xff]
        %v1102 = vld [vmem:[#allocation2 + $0x109] sm:$0xff]
        %v1103 = vld [vmem:[#allocation2 + $0x111] sm:$0xff]
        %v1104 = vld [vmem:[#allocation2 + $0x129] sm:$0xff]
        %v1105 = vld [vmem:[#allocation2 + $0x131] sm:$0xff]
        %v1106 = vld [vmem:[#allocation2 + $0x149] sm:$0xff]
        %v1107 = vld [vmem:[#allocation2 + $0x151] sm:$0xff]
        %v1108 = vld [vmem:[#allocation2 + $0x169] sm:$0xff]
        %v1109 = vld [vmem:[#allocation2 + $0x171] sm:$0xff]
        %v1110 = vld [vmem:[#allocation2 + $0x189] sm:$0xff]
        %v1111 = vld [vmem:[#allocation2 + $0x191] sm:$0xff]
        %v1112 = vld [vmem:[#allocation2 + $0x1a9] sm:$0xff]
        %v1113 = vld [vmem:[#allocation2 + $0x1b1] sm:$0xff]
        %v1114 = vld [vmem:[#allocation2 + $0x1c9] sm:$0xff]
        %v1115 = vld [vmem:[#allocation2 + $0x1d1] sm:$0xff]
        %v1116 = vld [vmem:[#allocation2 + $0x1e9] sm:$0xff]
        %v1117 = vld [vmem:[#allocation2 + $0x1f1] sm:$0xff]
        %v1118 = vperm.slane %v815, 2
        %v1119 = vmul.f32 %v1086, %v1118
        %v1120 = vmul.f32 %v1087, %v1118
        %v1121 = vmul.f32 %v1088, %v1118
        %v1122 = vmul.f32 %v1089, %v1118
        %v1123 = vmul.f32 %v1090, %v1118
        %v1124 = vmul.f32 %v1091, %v1118
        %v1125 = vmul.f32 %v1092, %v1118
        %v1126 = vmul.f32 %v1093, %v1118
        %v1127 = vmul.f32 %v1094, %v1118
        %v1128 = vmul.f32 %v1095, %v1118
        %v1129 = vmul.f32 %v1096, %v1118
        %v1130 = vmul.f32 %v1097, %v1118
        %v1131 = vmul.f32 %v1098, %v1118
        %v1132 = vmul.f32 %v1099, %v1118
        %v1133 = vmul.f32 %v1100, %v1118
        %v1134 = vmul.f32 %v1101, %v1118
        %v1135 = vmul.f32 %v1102, %v1118
        %v1136 = vmul.f32 %v1103, %v1118
        %v1137 = vmul.f32 %v1104, %v1118
        %v1138 = vmul.f32 %v1105, %v1118
        %v1139 = vmul.f32 %v1106, %v1118
        %v1140 = vmul.f32 %v1107, %v1118
        %v1141 = vmul.f32 %v1108, %v1118
        %v1142 = vmul.f32 %v1109, %v1118
        %v1143 = vmul.f32 %v1110, %v1118
        %v1144 = vmul.f32 %v1111, %v1118
        %v1145 = vmul.f32 %v1112, %v1118
        %v1146 = vmul.f32 %v1113, %v1118
        %v1147 = vmul.f32 %v1114, %v1118
        %v1148 = vmul.f32 %v1115, %v1118
        %v1149 = vmul.f32 %v1116, %v1118
        %v1150 = vmul.f32 %v1117, %v1118
        %v1151 = vadd.f32 %v1054, %v1119
        %v1152 = vadd.f32 %v1055, %v1120
        %v1153 = vadd.f32 %v1056, %v1121
        %v1154 = vadd.f32 %v1057, %v1122
        %v1155 = vadd.f32 %v1058, %v1123
        %v1156 = vadd.f32 %v1059, %v1124
        %v1157 = vadd.f32 %v1060, %v1125
        %v1158 = vadd.f32 %v1061, %v1126
        %v1159 = vadd.f32 %v1062, %v1127
        %v1160 = vadd.f32 %v1063, %v1128
        %v1161 = vadd.f32 %v1064, %v1129
        %v1162 = vadd.f32 %v1065, %v1130
        %v1163 = vadd.f32 %v1066, %v1131
        %v1164 = vadd.f32 %v1067, %v1132
        %v1165 = vadd.f32 %v1068, %v1133
        %v1166 = vadd.f32 %v1069, %v1134
        %v1167 = vadd.f32 %v1070, %v1135
        %v1168 = vadd.f32 %v1071, %v1136
        %v1169 = vadd.f32 %v1072, %v1137
        %v1170 = vadd.f32 %v1073, %v1138
        %v1171 = vadd.f32 %v1074, %v1139
        %v1172 = vadd.f32 %v1075, %v1140
        %v1173 = vadd.f32 %v1076, %v1141
        %v1174 = vadd.f32 %v1077, %v1142
        %v1175 = vadd.f32 %v1078, %v1143
        %v1176 = vadd.f32 %v1079, %v1144
        %v1177 = vadd.f32 %v1080, %v1145
        %v1178 = vadd.f32 %v1081, %v1146
        %v1179 = vadd.f32 %v1082, %v1147
        %v1180 = vadd.f32 %v1083, %v1148
        %v1181 = vadd.f32 %v1084, %v1149
        %v1182 = vadd.f32 %v1085, %v1150
        %v1183 = vld [vmem:[%s827 + $0x7] sm:$0xff]
        %v1184 = vld [vmem:[%s827 + $0xf] sm:$0xff]
        %v1185 = vld [vmem:[%s827 + $0x27] sm:$0xff]
        %v1186 = vld [vmem:[%s827 + $0x2f] sm:$0xff]
        %v1187 = vld [vmem:[%s827 + $0x47] sm:$0xff]
        %v1188 = vld [vmem:[%s827 + $0x4f] sm:$0xff]
        %v1189 = vld [vmem:[%s827 + $0x67] sm:$0xff]
        %v1190 = vld [vmem:[%s827 + $0x6f] sm:$0xff]
        %v1191 = vld [vmem:[%s827 + $0x87] sm:$0xff]
        %v1192 = vld [vmem:[%s827 + $0x8f] sm:$0xff]
        %v1193 = vld [vmem:[%s827 + $0xa7] sm:$0xff]
        %v1194 = vld [vmem:[%s827 + $0xaf] sm:$0xff]
        %v1195 = vld [vmem:[%s827 + $0xc7] sm:$0xff]
        %v1196 = vld [vmem:[%s827 + $0xcf] sm:$0xff]
        %v1197 = vld [vmem:[%s827 + $0xe7] sm:$0xff]
        %v1198 = vld [vmem:[%s827 + $0xef] sm:$0xff]
        %v1199 = vld [vmem:[%s827 + $0x107] sm:$0xff]
        %v1200 = vld [vmem:[%s827 + $0x10f] sm:$0xff]
        %v1201 = vld [vmem:[%s827 + $0x127] sm:$0xff]
        %v1202 = vld [vmem:[%s827 + $0x12f] sm:$0xff]
        %v1203 = vld [vmem:[%s827 + $0x147] sm:$0xff]
        %v1204 = vld [vmem:[%s827 + $0x14f] sm:$0xff]
        %v1205 = vld [vmem:[%s827 + $0x167] sm:$0xff]
        %v1206 = vld [vmem:[%s827 + $0x16f] sm:$0xff]
        %v1207 = vld [vmem:[%s827 + $0x187] sm:$0xff]
        %v1208 = vld [vmem:[%s827 + $0x18f] sm:$0xff]
        %v1209 = vld [vmem:[%s827 + $0x1a7] sm:$0xff]
        %v1210 = vld [vmem:[%s827 + $0x1af] sm:$0xff]
        %v1211 = vld [vmem:[%s827 + $0x1c7] sm:$0xff]
        %v1212 = vld [vmem:[%s827 + $0x1cf] sm:$0xff]
        %v1213 = vld [vmem:[%s827 + $0x1e7] sm:$0xff]
        %v1214 = vld [vmem:[%s827 + $0x1ef] sm:$0xff]
        %v1215 = vperm.slane %v816, 0
        %v1216 = vmul.f32 %v1183, %v1215
        %v1217 = vmul.f32 %v1184, %v1215
        %v1218 = vmul.f32 %v1185, %v1215
        %v1219 = vmul.f32 %v1186, %v1215
        %v1220 = vmul.f32 %v1187, %v1215
        %v1221 = vmul.f32 %v1188, %v1215
        %v1222 = vmul.f32 %v1189, %v1215
        %v1223 = vmul.f32 %v1190, %v1215
        %v1224 = vmul.f32 %v1191, %v1215
        %v1225 = vmul.f32 %v1192, %v1215
        %v1226 = vmul.f32 %v1193, %v1215
        %v1227 = vmul.f32 %v1194, %v1215
        %v1228 = vmul.f32 %v1195, %v1215
        %v1229 = vmul.f32 %v1196, %v1215
        %v1230 = vmul.f32 %v1197, %v1215
        %v1231 = vmul.f32 %v1198, %v1215
        %v1232 = vmul.f32 %v1199, %v1215
        %v1233 = vmul.f32 %v1200, %v1215
        %v1234 = vmul.f32 %v1201, %v1215
        %v1235 = vmul.f32 %v1202, %v1215
        %v1236 = vmul.f32 %v1203, %v1215
        %v1237 = vmul.f32 %v1204, %v1215
        %v1238 = vmul.f32 %v1205, %v1215
        %v1239 = vmul.f32 %v1206, %v1215
        %v1240 = vmul.f32 %v1207, %v1215
        %v1241 = vmul.f32 %v1208, %v1215
        %v1242 = vmul.f32 %v1209, %v1215
        %v1243 = vmul.f32 %v1210, %v1215
        %v1244 = vmul.f32 %v1211, %v1215
        %v1245 = vmul.f32 %v1212, %v1215
        %v1246 = vmul.f32 %v1213, %v1215
        %v1247 = vmul.f32 %v1214, %v1215
        %v1248 = vadd.f32 %v1151, %v1216
        %v1249 = vadd.f32 %v1152, %v1217
        %v1250 = vadd.f32 %v1153, %v1218
        %v1251 = vadd.f32 %v1154, %v1219
        %v1252 = vadd.f32 %v1155, %v1220
        %v1253 = vadd.f32 %v1156, %v1221
        %v1254 = vadd.f32 %v1157, %v1222
        %v1255 = vadd.f32 %v1158, %v1223
        %v1256 = vadd.f32 %v1159, %v1224
        %v1257 = vadd.f32 %v1160, %v1225
        %v1258 = vadd.f32 %v1161, %v1226
        %v1259 = vadd.f32 %v1162, %v1227
        %v1260 = vadd.f32 %v1163, %v1228
        %v1261 = vadd.f32 %v1164, %v1229
        %v1262 = vadd.f32 %v1165, %v1230
        %v1263 = vadd.f32 %v1166, %v1231
        %v1264 = vadd.f32 %v1167, %v1232
        %v1265 = vadd.f32 %v1168, %v1233
        %v1266 = vadd.f32 %v1169, %v1234
        %v1267 = vadd.f32 %v1170, %v1235
        %v1268 = vadd.f32 %v1171, %v1236
        %v1269 = vadd.f32 %v1172, %v1237
        %v1270 = vadd.f32 %v1173, %v1238
        %v1271 = vadd.f32 %v1174, %v1239
        %v1272 = vadd.f32 %v1175, %v1240
        %v1273 = vadd.f32 %v1176, %v1241
        %v1274 = vadd.f32 %v1177, %v1242
        %v1275 = vadd.f32 %v1178, %v1243
        %v1276 = vadd.f32 %v1179, %v1244
        %v1277 = vadd.f32 %v1180, %v1245
        %v1278 = vadd.f32 %v1181, %v1246
        %v1279 = vadd.f32 %v1182, %v1247
        %v1280 = vld [vmem:[%s827 + $0x8] sm:$0xff]
        %v1281 = vld [vmem:[%s827 + $0x10] sm:$0xff]
        %v1282 = vld [vmem:[%s827 + $0x28] sm:$0xff]
        %v1283 = vld [vmem:[%s827 + $0x30] sm:$0xff]
        %v1284 = vld [vmem:[%s827 + $0x48] sm:$0xff]
        %v1285 = vld [vmem:[%s827 + $0x50] sm:$0xff]
        %v1286 = vld [vmem:[%s827 + $0x68] sm:$0xff]
        %v1287 = vld [vmem:[%s827 + $0x70] sm:$0xff]
        %v1288 = vld [vmem:[%s827 + $0x88] sm:$0xff]
        %v1289 = vld [vmem:[%s827 + $0x90] sm:$0xff]
        %v1290 = vld [vmem:[%s827 + $0xa8] sm:$0xff]
        %v1291 = vld [vmem:[%s827 + $0xb0] sm:$0xff]
        %v1292 = vld [vmem:[%s827 + $0xc8] sm:$0xff]
        %v1293 = vld [vmem:[%s827 + $0xd0] sm:$0xff]
        %v1294 = vld [vmem:[%s827 + $0xe8] sm:$0xff]
        %v1295 = vld [vmem:[%s827 + $0xf0] sm:$0xff]
        %v1296 = vld [vmem:[%s827 + $0x108] sm:$0xff]
        %v1297 = vld [vmem:[%s827 + $0x110] sm:$0xff]
        %v1298 = vld [vmem:[%s827 + $0x128] sm:$0xff]
        %v1299 = vld [vmem:[%s827 + $0x130] sm:$0xff]
        %v1300 = vld [vmem:[%s827 + $0x148] sm:$0xff]
        %v1301 = vld [vmem:[%s827 + $0x150] sm:$0xff]
        %v1302 = vld [vmem:[%s827 + $0x168] sm:$0xff]
        %v1303 = vld [vmem:[%s827 + $0x170] sm:$0xff]
        %v1304 = vld [vmem:[%s827 + $0x188] sm:$0xff]
        %v1305 = vld [vmem:[%s827 + $0x190] sm:$0xff]
        %v1306 = vld [vmem:[%s827 + $0x1a8] sm:$0xff]
        %v1307 = vld [vmem:[%s827 + $0x1b0] sm:$0xff]
        %v1308 = vld [vmem:[%s827 + $0x1c8] sm:$0xff]
        %v1309 = vld [vmem:[%s827 + $0x1d0] sm:$0xff]
        %v1310 = vld [vmem:[%s827 + $0x1e8] sm:$0xff]
        %v1311 = vld [vmem:[%s827 + $0x1f0] sm:$0xff]
        %v1312 = vperm.slane %v816, 1
        %v1313 = vmul.f32 %v1280, %v1312
        %v1314 = vmul.f32 %v1281, %v1312
        %v1315 = vmul.f32 %v1282, %v1312
        %v1316 = vmul.f32 %v1283, %v1312
        %v1317 = vmul.f32 %v1284, %v1312
        %v1318 = vmul.f32 %v1285, %v1312
        %v1319 = vmul.f32 %v1286, %v1312
        %v1320 = vmul.f32 %v1287, %v1312
        %v1321 = vmul.f32 %v1288, %v1312
        %v1322 = vmul.f32 %v1289, %v1312
        %v1323 = vmul.f32 %v1290, %v1312
        %v1324 = vmul.f32 %v1291, %v1312
        %v1325 = vmul.f32 %v1292, %v1312
        %v1326 = vmul.f32 %v1293, %v1312
        %v1327 = vmul.f32 %v1294, %v1312
        %v1328 = vmul.f32 %v1295, %v1312
        %v1329 = vmul.f32 %v1296, %v1312
        %v1330 = vmul.f32 %v1297, %v1312
        %v1331 = vmul.f32 %v1298, %v1312
        %v1332 = vmul.f32 %v1299, %v1312
        %v1333 = vmul.f32 %v1300, %v1312
        %v1334 = vmul.f32 %v1301, %v1312
        %v1335 = vmul.f32 %v1302, %v1312
        %v1336 = vmul.f32 %v1303, %v1312
        %v1337 = vmul.f32 %v1304, %v1312
        %v1338 = vmul.f32 %v1305, %v1312
        %v1339 = vmul.f32 %v1306, %v1312
        %v1340 = vmul.f32 %v1307, %v1312
        %v1341 = vmul.f32 %v1308, %v1312
        %v1342 = vmul.f32 %v1309, %v1312
        %v1343 = vmul.f32 %v1310, %v1312
        %v1344 = vmul.f32 %v1311, %v1312
        %v1345 = vadd.f32 %v1248, %v1313
        %v1346 = vadd.f32 %v1249, %v1314
        %v1347 = vadd.f32 %v1250, %v1315
        %v1348 = vadd.f32 %v1251, %v1316
        %v1349 = vadd.f32 %v1252, %v1317
        %v1350 = vadd.f32 %v1253, %v1318
        %v1351 = vadd.f32 %v1254, %v1319
        %v1352 = vadd.f32 %v1255, %v1320
        %v1353 = vadd.f32 %v1256, %v1321
        %v1354 = vadd.f32 %v1257, %v1322
        %v1355 = vadd.f32 %v1258, %v1323
        %v1356 = vadd.f32 %v1259, %v1324
        %v1357 = vadd.f32 %v1260, %v1325
        %v1358 = vadd.f32 %v1261, %v1326
        %v1359 = vadd.f32 %v1262, %v1327
        %v1360 = vadd.f32 %v1263, %v1328
        %v1361 = vadd.f32 %v1264, %v1329
        %v1362 = vadd.f32 %v1265, %v1330
        %v1363 = vadd.f32 %v1266, %v1331
        %v1364 = vadd.f32 %v1267, %v1332
        %v1365 = vadd.f32 %v1268, %v1333
        %v1366 = vadd.f32 %v1269, %v1334
        %v1367 = vadd.f32 %v1270, %v1335
        %v1368 = vadd.f32 %v1271, %v1336
        %v1369 = vadd.f32 %v1272, %v1337
        %v1370 = vadd.f32 %v1273, %v1338
        %v1371 = vadd.f32 %v1274, %v1339
        %v1372 = vadd.f32 %v1275, %v1340
        %v1373 = vadd.f32 %v1276, %v1341
        %v1374 = vadd.f32 %v1277, %v1342
        %v1375 = vadd.f32 %v1278, %v1343
        %v1376 = vadd.f32 %v1279, %v1344
        %v1377 = vld [vmem:[%s827 + $0x9] sm:$0xff]
        %v1378 = vld [vmem:[%s827 + $0x11] sm:$0xff]
        %v1379 = vld [vmem:[%s827 + $0x29] sm:$0xff]
        %v1380 = vld [vmem:[%s827 + $0x31] sm:$0xff]
        %v1381 = vld [vmem:[%s827 + $0x49] sm:$0xff]
        %v1382 = vld [vmem:[%s827 + $0x51] sm:$0xff]
        %v1383 = vld [vmem:[%s827 + $0x69] sm:$0xff]
        %v1384 = vld [vmem:[%s827 + $0x71] sm:$0xff]
        %v1385 = vld [vmem:[%s827 + $0x89] sm:$0xff]
        %v1386 = vld [vmem:[%s827 + $0x91] sm:$0xff]
        %v1387 = vld [vmem:[%s827 + $0xa9] sm:$0xff]
        %v1388 = vld [vmem:[%s827 + $0xb1] sm:$0xff]
        %v1389 = vld [vmem:[%s827 + $0xc9] sm:$0xff]
        %v1390 = vld [vmem:[%s827 + $0xd1] sm:$0xff]
        %v1391 = vld [vmem:[%s827 + $0xe9] sm:$0xff]
        %v1392 = vld [vmem:[%s827 + $0xf1] sm:$0xff]
        %v1393 = vld [vmem:[%s827 + $0x109] sm:$0xff]
        %v1394 = vld [vmem:[%s827 + $0x111] sm:$0xff]
        %v1395 = vld [vmem:[%s827 + $0x129] sm:$0xff]
        %v1396 = vld [vmem:[%s827 + $0x131] sm:$0xff]
        %v1397 = vld [vmem:[%s827 + $0x149] sm:$0xff]
        %v1398 = vld [vmem:[%s827 + $0x151] sm:$0xff]
        %v1399 = vld [vmem:[%s827 + $0x169] sm:$0xff]
        %v1400 = vld [vmem:[%s827 + $0x171] sm:$0xff]
        %v1401 = vld [vmem:[%s827 + $0x189] sm:$0xff]
        %v1402 = vld [vmem:[%s827 + $0x191] sm:$0xff]
        %v1403 = vld [vmem:[%s827 + $0x1a9] sm:$0xff]
        %v1404 = vld [vmem:[%s827 + $0x1b1] sm:$0xff]
        %v1405 = vld [vmem:[%s827 + $0x1c9] sm:$0xff]
        %v1406 = vld [vmem:[%s827 + $0x1d1] sm:$0xff]
        %v1407 = vld [vmem:[%s827 + $0x1e9] sm:$0xff]
        %v1408 = vld [vmem:[%s827 + $0x1f1] sm:$0xff]
        %v1409 = vperm.slane %v816, 2
        %v1410 = vmul.f32 %v1377, %v1409
        %v1411 = vmul.f32 %v1378, %v1409
        %v1412 = vmul.f32 %v1379, %v1409
        %v1413 = vmul.f32 %v1380, %v1409
        %v1414 = vmul.f32 %v1381, %v1409
        %v1415 = vmul.f32 %v1382, %v1409
        %v1416 = vmul.f32 %v1383, %v1409
        %v1417 = vmul.f32 %v1384, %v1409
        %v1418 = vmul.f32 %v1385, %v1409
        %v1419 = vmul.f32 %v1386, %v1409
        %v1420 = vmul.f32 %v1387, %v1409
        %v1421 = vmul.f32 %v1388, %v1409
        %v1422 = vmul.f32 %v1389, %v1409
        %v1423 = vmul.f32 %v1390, %v1409
        %v1424 = vmul.f32 %v1391, %v1409
        %v1425 = vmul.f32 %v1392, %v1409
        %v1426 = vmul.f32 %v1393, %v1409
        %v1427 = vmul.f32 %v1394, %v1409
        %v1428 = vmul.f32 %v1395, %v1409
        %v1429 = vmul.f32 %v1396, %v1409
        %v1430 = vmul.f32 %v1397, %v1409
        %v1431 = vmul.f32 %v1398, %v1409
        %v1432 = vmul.f32 %v1399, %v1409
        %v1433 = vmul.f32 %v1400, %v1409
        %v1434 = vmul.f32 %v1401, %v1409
        %v1435 = vmul.f32 %v1402, %v1409
        %v1436 = vmul.f32 %v1403, %v1409
        %v1437 = vmul.f32 %v1404, %v1409
        %v1438 = vmul.f32 %v1405, %v1409
        %v1439 = vmul.f32 %v1406, %v1409
        %v1440 = vmul.f32 %v1407, %v1409
        %v1441 = vmul.f32 %v1408, %v1409
        %v1442 = vadd.f32 %v1345, %v1410
        %v1443 = vadd.f32 %v1346, %v1411
        %v1444 = vadd.f32 %v1347, %v1412
        %v1445 = vadd.f32 %v1348, %v1413
        %v1446 = vadd.f32 %v1349, %v1414
        %v1447 = vadd.f32 %v1350, %v1415
        %v1448 = vadd.f32 %v1351, %v1416
        %v1449 = vadd.f32 %v1352, %v1417
        %v1450 = vadd.f32 %v1353, %v1418
        %v1451 = vadd.f32 %v1354, %v1419
        %v1452 = vadd.f32 %v1355, %v1420
        %v1453 = vadd.f32 %v1356, %v1421
        %v1454 = vadd.f32 %v1357, %v1422
        %v1455 = vadd.f32 %v1358, %v1423
        %v1456 = vadd.f32 %v1359, %v1424
        %v1457 = vadd.f32 %v1360, %v1425
        %v1458 = vadd.f32 %v1361, %v1426
        %v1459 = vadd.f32 %v1362, %v1427
        %v1460 = vadd.f32 %v1363, %v1428
        %v1461 = vadd.f32 %v1364, %v1429
        %v1462 = vadd.f32 %v1365, %v1430
        %v1463 = vadd.f32 %v1366, %v1431
        %v1464 = vadd.f32 %v1367, %v1432
        %v1465 = vadd.f32 %v1368, %v1433
        %v1466 = vadd.f32 %v1369, %v1434
        %v1467 = vadd.f32 %v1370, %v1435
        %v1468 = vadd.f32 %v1371, %v1436
        %v1469 = vadd.f32 %v1372, %v1437
        %v1470 = vadd.f32 %v1373, %v1438
        %v1471 = vadd.f32 %v1374, %v1439
        %v1472 = vadd.f32 %v1375, %v1440
        %v1473 = vadd.f32 %v1376, %v1441
        %s1474 = scalar_lea.vmem [#allocation2], 64
        %v1475 = vld [vmem:[%s1474 + $0x7] sm:$0xff]
        %v1476 = vld [vmem:[%s1474 + $0xf] sm:$0xff]
        %v1477 = vld [vmem:[%s1474 + $0x27] sm:$0xff]
        %v1478 = vld [vmem:[%s1474 + $0x2f] sm:$0xff]
        %v1479 = vld [vmem:[%s1474 + $0x47] sm:$0xff]
        %v1480 = vld [vmem:[%s1474 + $0x4f] sm:$0xff]
        %v1481 = vld [vmem:[%s1474 + $0x67] sm:$0xff]
        %v1482 = vld [vmem:[%s1474 + $0x6f] sm:$0xff]
        %v1483 = vld [vmem:[%s1474 + $0x87] sm:$0xff]
        %v1484 = vld [vmem:[%s1474 + $0x8f] sm:$0xff]
        %v1485 = vld [vmem:[%s1474 + $0xa7] sm:$0xff]
        %v1486 = vld [vmem:[%s1474 + $0xaf] sm:$0xff]
        %v1487 = vld [vmem:[%s1474 + $0xc7] sm:$0xff]
        %v1488 = vld [vmem:[%s1474 + $0xcf] sm:$0xff]
        %v1489 = vld [vmem:[%s1474 + $0xe7] sm:$0xff]
        %v1490 = vld [vmem:[%s1474 + $0xef] sm:$0xff]
        %v1491 = vld [vmem:[%s1474 + $0x107] sm:$0xff]
        %v1492 = vld [vmem:[%s1474 + $0x10f] sm:$0xff]
        %v1493 = vld [vmem:[%s1474 + $0x127] sm:$0xff]
        %v1494 = vld [vmem:[%s1474 + $0x12f] sm:$0xff]
        %v1495 = vld [vmem:[%s1474 + $0x147] sm:$0xff]
        %v1496 = vld [vmem:[%s1474 + $0x14f] sm:$0xff]
        %v1497 = vld [vmem:[%s1474 + $0x167] sm:$0xff]
        %v1498 = vld [vmem:[%s1474 + $0x16f] sm:$0xff]
        %v1499 = vld [vmem:[%s1474 + $0x187] sm:$0xff]
        %v1500 = vld [vmem:[%s1474 + $0x18f] sm:$0xff]
        %v1501 = vld [vmem:[%s1474 + $0x1a7] sm:$0xff]
        %v1502 = vld [vmem:[%s1474 + $0x1af] sm:$0xff]
        %v1503 = vld [vmem:[%s1474 + $0x1c7] sm:$0xff]
        %v1504 = vld [vmem:[%s1474 + $0x1cf] sm:$0xff]
        %v1505 = vld [vmem:[%s1474 + $0x1e7] sm:$0xff]
        %v1506 = vld [vmem:[%s1474 + $0x1ef] sm:$0xff]
        %v1507 = vperm.slane %v817, 0
        %v1508 = vmul.f32 %v1475, %v1507
        %v1509 = vmul.f32 %v1476, %v1507
        %v1510 = vmul.f32 %v1477, %v1507
        %v1511 = vmul.f32 %v1478, %v1507
        %v1512 = vmul.f32 %v1479, %v1507
        %v1513 = vmul.f32 %v1480, %v1507
        %v1514 = vmul.f32 %v1481, %v1507
        %v1515 = vmul.f32 %v1482, %v1507
        %v1516 = vmul.f32 %v1483, %v1507
        %v1517 = vmul.f32 %v1484, %v1507
        %v1518 = vmul.f32 %v1485, %v1507
        %v1519 = vmul.f32 %v1486, %v1507
        %v1520 = vmul.f32 %v1487, %v1507
        %v1521 = vmul.f32 %v1488, %v1507
        %v1522 = vmul.f32 %v1489, %v1507
        %v1523 = vmul.f32 %v1490, %v1507
        %v1524 = vmul.f32 %v1491, %v1507
        %v1525 = vmul.f32 %v1492, %v1507
        %v1526 = vmul.f32 %v1493, %v1507
        %v1527 = vmul.f32 %v1494, %v1507
        %v1528 = vmul.f32 %v1495, %v1507
        %v1529 = vmul.f32 %v1496, %v1507
        %v1530 = vmul.f32 %v1497, %v1507
        %v1531 = vmul.f32 %v1498, %v1507
        %v1532 = vmul.f32 %v1499, %v1507
        %v1533 = vmul.f32 %v1500, %v1507
        %v1534 = vmul.f32 %v1501, %v1507
        %v1535 = vmul.f32 %v1502, %v1507
        %v1536 = vmul.f32 %v1503, %v1507
        %v1537 = vmul.f32 %v1504, %v1507
        %v1538 = vmul.f32 %v1505, %v1507
        %v1539 = vmul.f32 %v1506, %v1507
        %v1540 = vadd.f32 %v1442, %v1508
        %v1541 = vadd.f32 %v1443, %v1509
        %v1542 = vadd.f32 %v1444, %v1510
        %v1543 = vadd.f32 %v1445, %v1511
        %v1544 = vadd.f32 %v1446, %v1512
        %v1545 = vadd.f32 %v1447, %v1513
        %v1546 = vadd.f32 %v1448, %v1514
        %v1547 = vadd.f32 %v1449, %v1515
        %v1548 = vadd.f32 %v1450, %v1516
        %v1549 = vadd.f32 %v1451, %v1517
        %v1550 = vadd.f32 %v1452, %v1518
        %v1551 = vadd.f32 %v1453, %v1519
        %v1552 = vadd.f32 %v1454, %v1520
        %v1553 = vadd.f32 %v1455, %v1521
        %v1554 = vadd.f32 %v1456, %v1522
        %v1555 = vadd.f32 %v1457, %v1523
        %v1556 = vadd.f32 %v1458, %v1524
        %v1557 = vadd.f32 %v1459, %v1525
        %v1558 = vadd.f32 %v1460, %v1526
        %v1559 = vadd.f32 %v1461, %v1527
        %v1560 = vadd.f32 %v1462, %v1528
        %v1561 = vadd.f32 %v1463, %v1529
        %v1562 = vadd.f32 %v1464, %v1530
        %v1563 = vadd.f32 %v1465, %v1531
        %v1564 = vadd.f32 %v1466, %v1532
        %v1565 = vadd.f32 %v1467, %v1533
        %v1566 = vadd.f32 %v1468, %v1534
        %v1567 = vadd.f32 %v1469, %v1535
        %v1568 = vadd.f32 %v1470, %v1536
        %v1569 = vadd.f32 %v1471, %v1537
        %v1570 = vadd.f32 %v1472, %v1538
        %v1571 = vadd.f32 %v1473, %v1539
        %v1572 = vld [vmem:[%s1474 + $0x8] sm:$0xff]
        %v1573 = vld [vmem:[%s1474 + $0x10] sm:$0xff]
        %v1574 = vld [vmem:[%s1474 + $0x28] sm:$0xff]
        %v1575 = vld [vmem:[%s1474 + $0x30] sm:$0xff]
        %v1576 = vld [vmem:[%s1474 + $0x48] sm:$0xff]
        %v1577 = vld [vmem:[%s1474 + $0x50] sm:$0xff]
        %v1578 = vld [vmem:[%s1474 + $0x68] sm:$0xff]
        %v1579 = vld [vmem:[%s1474 + $0x70] sm:$0xff]
        %v1580 = vld [vmem:[%s1474 + $0x88] sm:$0xff]
        %v1581 = vld [vmem:[%s1474 + $0x90] sm:$0xff]
        %v1582 = vld [vmem:[%s1474 + $0xa8] sm:$0xff]
        %v1583 = vld [vmem:[%s1474 + $0xb0] sm:$0xff]
        %v1584 = vld [vmem:[%s1474 + $0xc8] sm:$0xff]
        %v1585 = vld [vmem:[%s1474 + $0xd0] sm:$0xff]
        %v1586 = vld [vmem:[%s1474 + $0xe8] sm:$0xff]
        %v1587 = vld [vmem:[%s1474 + $0xf0] sm:$0xff]
        %v1588 = vld [vmem:[%s1474 + $0x108] sm:$0xff]
        %v1589 = vld [vmem:[%s1474 + $0x110] sm:$0xff]
        %v1590 = vld [vmem:[%s1474 + $0x128] sm:$0xff]
        %v1591 = vld [vmem:[%s1474 + $0x130] sm:$0xff]
        %v1592 = vld [vmem:[%s1474 + $0x148] sm:$0xff]
        %v1593 = vld [vmem:[%s1474 + $0x150] sm:$0xff]
        %v1594 = vld [vmem:[%s1474 + $0x168] sm:$0xff]
        %v1595 = vld [vmem:[%s1474 + $0x170] sm:$0xff]
        %v1596 = vld [vmem:[%s1474 + $0x188] sm:$0xff]
        %v1597 = vld [vmem:[%s1474 + $0x190] sm:$0xff]
        %v1598 = vld [vmem:[%s1474 + $0x1a8] sm:$0xff]
        %v1599 = vld [vmem:[%s1474 + $0x1b0] sm:$0xff]
        %v1600 = vld [vmem:[%s1474 + $0x1c8] sm:$0xff]
        %v1601 = vld [vmem:[%s1474 + $0x1d0] sm:$0xff]
        %v1602 = vld [vmem:[%s1474 + $0x1e8] sm:$0xff]
        %v1603 = vld [vmem:[%s1474 + $0x1f0] sm:$0xff]
        %v1604 = vperm.slane %v817, 1
        %v1605 = vmul.f32 %v1572, %v1604
        %v1606 = vmul.f32 %v1573, %v1604
        %v1607 = vmul.f32 %v1574, %v1604
        %v1608 = vmul.f32 %v1575, %v1604
        %v1609 = vmul.f32 %v1576, %v1604
        %v1610 = vmul.f32 %v1577, %v1604
        %v1611 = vmul.f32 %v1578, %v1604
        %v1612 = vmul.f32 %v1579, %v1604
        %v1613 = vmul.f32 %v1580, %v1604
        %v1614 = vmul.f32 %v1581, %v1604
        %v1615 = vmul.f32 %v1582, %v1604
        %v1616 = vmul.f32 %v1583, %v1604
        %v1617 = vmul.f32 %v1584, %v1604
        %v1618 = vmul.f32 %v1585, %v1604
        %v1619 = vmul.f32 %v1586, %v1604
        %v1620 = vmul.f32 %v1587, %v1604
        %v1621 = vmul.f32 %v1588, %v1604
        %v1622 = vmul.f32 %v1589, %v1604
        %v1623 = vmul.f32 %v1590, %v1604
        %v1624 = vmul.f32 %v1591, %v1604
        %v1625 = vmul.f32 %v1592, %v1604
        %v1626 = vmul.f32 %v1593, %v1604
        %v1627 = vmul.f32 %v1594, %v1604
        %v1628 = vmul.f32 %v1595, %v1604
        %v1629 = vmul.f32 %v1596, %v1604
        %v1630 = vmul.f32 %v1597, %v1604
        %v1631 = vmul.f32 %v1598, %v1604
        %v1632 = vmul.f32 %v1599, %v1604
        %v1633 = vmul.f32 %v1600, %v1604
        %v1634 = vmul.f32 %v1601, %v1604
        %v1635 = vmul.f32 %v1602, %v1604
        %v1636 = vmul.f32 %v1603, %v1604
        %v1637 = vadd.f32 %v1540, %v1605
        %v1638 = vadd.f32 %v1541, %v1606
        %v1639 = vadd.f32 %v1542, %v1607
        %v1640 = vadd.f32 %v1543, %v1608
        %v1641 = vadd.f32 %v1544, %v1609
        %v1642 = vadd.f32 %v1545, %v1610
        %v1643 = vadd.f32 %v1546, %v1611
        %v1644 = vadd.f32 %v1547, %v1612
        %v1645 = vadd.f32 %v1548, %v1613
        %v1646 = vadd.f32 %v1549, %v1614
        %v1647 = vadd.f32 %v1550, %v1615
        %v1648 = vadd.f32 %v1551, %v1616
        %v1649 = vadd.f32 %v1552, %v1617
        %v1650 = vadd.f32 %v1553, %v1618
        %v1651 = vadd.f32 %v1554, %v1619
        %v1652 = vadd.f32 %v1555, %v1620
        %v1653 = vadd.f32 %v1556, %v1621
        %v1654 = vadd.f32 %v1557, %v1622
        %v1655 = vadd.f32 %v1558, %v1623
        %v1656 = vadd.f32 %v1559, %v1624
        %v1657 = vadd.f32 %v1560, %v1625
        %v1658 = vadd.f32 %v1561, %v1626
        %v1659 = vadd.f32 %v1562, %v1627
        %v1660 = vadd.f32 %v1563, %v1628
        %v1661 = vadd.f32 %v1564, %v1629
        %v1662 = vadd.f32 %v1565, %v1630
        %v1663 = vadd.f32 %v1566, %v1631
        %v1664 = vadd.f32 %v1567, %v1632
        %v1665 = vadd.f32 %v1568, %v1633
        %v1666 = vadd.f32 %v1569, %v1634
        %v1667 = vadd.f32 %v1570, %v1635
        %v1668 = vadd.f32 %v1571, %v1636
        %v1669 = vld [vmem:[%s1474 + $0x9] sm:$0xff]
        %v1670 = vld [vmem:[%s1474 + $0x11] sm:$0xff]
        %v1671 = vld [vmem:[%s1474 + $0x29] sm:$0xff]
        %v1672 = vld [vmem:[%s1474 + $0x31] sm:$0xff]
        %v1673 = vld [vmem:[%s1474 + $0x49] sm:$0xff]
        %v1674 = vld [vmem:[%s1474 + $0x51] sm:$0xff]
        %v1675 = vld [vmem:[%s1474 + $0x69] sm:$0xff]
        %v1676 = vld [vmem:[%s1474 + $0x71] sm:$0xff]
        %v1677 = vld [vmem:[%s1474 + $0x89] sm:$0xff]
        %v1678 = vld [vmem:[%s1474 + $0x91] sm:$0xff]
        %v1679 = vld [vmem:[%s1474 + $0xa9] sm:$0xff]
        %v1680 = vld [vmem:[%s1474 + $0xb1] sm:$0xff]
        %v1681 = vld [vmem:[%s1474 + $0xc9] sm:$0xff]
        %v1682 = vld [vmem:[%s1474 + $0xd1] sm:$0xff]
        %v1683 = vld [vmem:[%s1474 + $0xe9] sm:$0xff]
        %v1684 = vld [vmem:[%s1474 + $0xf1] sm:$0xff]
        %v1685 = vld [vmem:[%s1474 + $0x109] sm:$0xff]
        %v1686 = vld [vmem:[%s1474 + $0x111] sm:$0xff]
        %v1687 = vld [vmem:[%s1474 + $0x129] sm:$0xff]
        %v1688 = vld [vmem:[%s1474 + $0x131] sm:$0xff]
        %v1689 = vld [vmem:[%s1474 + $0x149] sm:$0xff]
        %v1690 = vld [vmem:[%s1474 + $0x151] sm:$0xff]
        %v1691 = vld [vmem:[%s1474 + $0x169] sm:$0xff]
        %v1692 = vld [vmem:[%s1474 + $0x171] sm:$0xff]
        %v1693 = vld [vmem:[%s1474 + $0x189] sm:$0xff]
        %v1694 = vld [vmem:[%s1474 + $0x191] sm:$0xff]
        %v1695 = vld [vmem:[%s1474 + $0x1a9] sm:$0xff]
        %v1696 = vld [vmem:[%s1474 + $0x1b1] sm:$0xff]
        %v1697 = vld [vmem:[%s1474 + $0x1c9] sm:$0xff]
        %v1698 = vld [vmem:[%s1474 + $0x1d1] sm:$0xff]
        %v1699 = vld [vmem:[%s1474 + $0x1e9] sm:$0xff]
        %v1700 = vld [vmem:[%s1474 + $0x1f1] sm:$0xff]
        %v1701 = vperm.slane %v817, 2
        %v1702 = vmul.f32 %v1669, %v1701
        %v1703 = vmul.f32 %v1670, %v1701
        %v1704 = vmul.f32 %v1671, %v1701
        %v1705 = vmul.f32 %v1672, %v1701
        %v1706 = vmul.f32 %v1673, %v1701
        %v1707 = vmul.f32 %v1674, %v1701
        %v1708 = vmul.f32 %v1675, %v1701
        %v1709 = vmul.f32 %v1676, %v1701
        %v1710 = vmul.f32 %v1677, %v1701
        %v1711 = vmul.f32 %v1678, %v1701
        %v1712 = vmul.f32 %v1679, %v1701
        %v1713 = vmul.f32 %v1680, %v1701
        %v1714 = vmul.f32 %v1681, %v1701
        %v1715 = vmul.f32 %v1682, %v1701
        %v1716 = vmul.f32 %v1683, %v1701
        %v1717 = vmul.f32 %v1684, %v1701
        %v1718 = vmul.f32 %v1685, %v1701
        %v1719 = vmul.f32 %v1686, %v1701
        %v1720 = vmul.f32 %v1687, %v1701
        %v1721 = vmul.f32 %v1688, %v1701
        %v1722 = vmul.f32 %v1689, %v1701
        %v1723 = vmul.f32 %v1690, %v1701
        %v1724 = vmul.f32 %v1691, %v1701
        %v1725 = vmul.f32 %v1692, %v1701
        %v1726 = vmul.f32 %v1693, %v1701
        %v1727 = vmul.f32 %v1694, %v1701
        %v1728 = vmul.f32 %v1695, %v1701
        %v1729 = vmul.f32 %v1696, %v1701
        %v1730 = vmul.f32 %v1697, %v1701
        %v1731 = vmul.f32 %v1698, %v1701
        %v1732 = vmul.f32 %v1699, %v1701
        %v1733 = vmul.f32 %v1700, %v1701
        %v1734 = vadd.f32 %v1637, %v1702
        %v1735 = vadd.f32 %v1638, %v1703
        %v1736 = vadd.f32 %v1639, %v1704
        %v1737 = vadd.f32 %v1640, %v1705
        %v1738 = vadd.f32 %v1641, %v1706
        %v1739 = vadd.f32 %v1642, %v1707
        %v1740 = vadd.f32 %v1643, %v1708
        %v1741 = vadd.f32 %v1644, %v1709
        %v1742 = vadd.f32 %v1645, %v1710
        %v1743 = vadd.f32 %v1646, %v1711
        %v1744 = vadd.f32 %v1647, %v1712
        %v1745 = vadd.f32 %v1648, %v1713
        %v1746 = vadd.f32 %v1649, %v1714
        %v1747 = vadd.f32 %v1650, %v1715
        %v1748 = vadd.f32 %v1651, %v1716
        %v1749 = vadd.f32 %v1652, %v1717
        %v1750 = vadd.f32 %v1653, %v1718
        %v1751 = vadd.f32 %v1654, %v1719
        %v1752 = vadd.f32 %v1655, %v1720
        %v1753 = vadd.f32 %v1656, %v1721
        %v1754 = vadd.f32 %v1657, %v1722
        %v1755 = vadd.f32 %v1658, %v1723
        %v1756 = vadd.f32 %v1659, %v1724
        %v1757 = vadd.f32 %v1660, %v1725
        %v1758 = vadd.f32 %v1661, %v1726
        %v1759 = vadd.f32 %v1662, %v1727
        %v1760 = vadd.f32 %v1663, %v1728
        %v1761 = vadd.f32 %v1664, %v1729
        %v1762 = vadd.f32 %v1665, %v1730
        %v1763 = vadd.f32 %v1666, %v1731
        %v1764 = vadd.f32 %v1667, %v1732
        %v1765 = vadd.f32 %v1668, %v1733
        %v1766 = vld [vmem:[%s5] sm:$0x1]
        %v1768 = vperm.slane %v1766, 0
        %v1770 = vmul.f32 %v1734, %v1768
        %v1771 = vmul.f32 %v1735, %v1768
        %v1772 = vmul.f32 %v1736, %v1768
        %v1773 = vmul.f32 %v1737, %v1768
        %v1774 = vmul.f32 %v1738, %v1768
        %v1775 = vmul.f32 %v1739, %v1768
        %v1776 = vmul.f32 %v1740, %v1768
        %v1777 = vmul.f32 %v1741, %v1768
        %v1778 = vmul.f32 %v1742, %v1768
        %v1779 = vmul.f32 %v1743, %v1768
        %v1780 = vmul.f32 %v1744, %v1768
        %v1781 = vmul.f32 %v1745, %v1768
        %v1782 = vmul.f32 %v1746, %v1768
        %v1783 = vmul.f32 %v1747, %v1768
        %v1784 = vmul.f32 %v1748, %v1768
        %v1785 = vmul.f32 %v1749, %v1768
        %v1786 = vmul.f32 %v1750, %v1768
        %v1787 = vmul.f32 %v1751, %v1768
        %v1788 = vmul.f32 %v1752, %v1768
        %v1789 = vmul.f32 %v1753, %v1768
        %v1790 = vmul.f32 %v1754, %v1768
        %v1791 = vmul.f32 %v1755, %v1768
        %v1792 = vmul.f32 %v1756, %v1768
        %v1793 = vmul.f32 %v1757, %v1768
        %v1794 = vmul.f32 %v1758, %v1768
        %v1795 = vmul.f32 %v1759, %v1768
        %v1796 = vmul.f32 %v1760, %v1768
        %v1797 = vmul.f32 %v1761, %v1768
        %v1798 = vmul.f32 %v1762, %v1768
        %v1799 = vmul.f32 %v1763, %v1768
        %v1800 = vmul.f32 %v1764, %v1768
        %v1801 = vmul.f32 %v1765, %v1768
        %v1802 = vld [vmem:[%s6] sm:$0x1]
        %v1804 = vperm.slane %v1802, 0
        %v1806 = vadd.f32 %v1770, %v1804
        %v1807 = vadd.f32 %v1771, %v1804
        %v1808 = vadd.f32 %v1772, %v1804
        %v1809 = vadd.f32 %v1773, %v1804
        %v1810 = vadd.f32 %v1774, %v1804
        %v1811 = vadd.f32 %v1775, %v1804
        %v1812 = vadd.f32 %v1776, %v1804
        %v1813 = vadd.f32 %v1777, %v1804
        %v1814 = vadd.f32 %v1778, %v1804
        %v1815 = vadd.f32 %v1779, %v1804
        %v1816 = vadd.f32 %v1780, %v1804
        %v1817 = vadd.f32 %v1781, %v1804
        %v1818 = vadd.f32 %v1782, %v1804
        %v1819 = vadd.f32 %v1783, %v1804
        %v1820 = vadd.f32 %v1784, %v1804
        %v1821 = vadd.f32 %v1785, %v1804
        %v1822 = vadd.f32 %v1786, %v1804
        %v1823 = vadd.f32 %v1787, %v1804
        %v1824 = vadd.f32 %v1788, %v1804
        %v1825 = vadd.f32 %v1789, %v1804
        %v1826 = vadd.f32 %v1790, %v1804
        %v1827 = vadd.f32 %v1791, %v1804
        %v1828 = vadd.f32 %v1792, %v1804
        %v1829 = vadd.f32 %v1793, %v1804
        %v1830 = vadd.f32 %v1794, %v1804
        %v1831 = vadd.f32 %v1795, %v1804
        %v1832 = vadd.f32 %v1796, %v1804
        %v1833 = vadd.f32 %v1797, %v1804
        %v1834 = vadd.f32 %v1798, %v1804
        %v1835 = vadd.f32 %v1799, %v1804
        %v1836 = vadd.f32 %v1800, %v1804
        %v1837 = vadd.f32 %v1801, %v1804
        %v1838 = vpack.c.bf16 %v1807, %v1806
        %v1839 = vpack.c.bf16 %v1809, %v1808
        %v1840 = vpack.c.bf16 %v1811, %v1810
        %v1841 = vpack.c.bf16 %v1813, %v1812
        %v1842 = vpack.c.bf16 %v1815, %v1814
        %v1843 = vpack.c.bf16 %v1817, %v1816
        %v1844 = vpack.c.bf16 %v1819, %v1818
        %v1845 = vpack.c.bf16 %v1821, %v1820
        %v1846 = vpack.c.bf16 %v1823, %v1822
        %v1847 = vpack.c.bf16 %v1825, %v1824
        %v1848 = vpack.c.bf16 %v1827, %v1826
        %v1849 = vpack.c.bf16 %v1829, %v1828
        %v1850 = vpack.c.bf16 %v1831, %v1830
        %v1851 = vpack.c.bf16 %v1833, %v1832
        %v1852 = vpack.c.bf16 %v1835, %v1834
        %v1853 = vpack.c.bf16 %v1837, %v1836
        %v1854 = vld [vmem:[#allocation9] sm:$0xf]
        %v1855 = vld [vmem:[#allocation9 + $0x4] sm:$0xf]
        %v1856 = vld [vmem:[#allocation9 + $0x8] sm:$0xf]
        %v1857 = vld [vmem:[#allocation9 + $0xc] sm:$0xf]
        %v1858 = vld [vmem:[#allocation9 + $0x10] sm:$0xf]
        %v1859 = vld [vmem:[#allocation9 + $0x14] sm:$0xf]
        %v1860 = vld [vmem:[#allocation9 + $0x18] sm:$0xf]
        %v1861 = vld [vmem:[#allocation9 + $0x1c] sm:$0xf]
        %v1862 = vld [vmem:[#allocation9 + $0x20] sm:$0xf]
        %v1863 = vld [vmem:[#allocation9 + $0x24] sm:$0xf]
        %v1864 = vld [vmem:[#allocation9 + $0x28] sm:$0xf]
        %v1865 = vld [vmem:[#allocation9 + $0x2c] sm:$0xf]
        %v1866 = vld [vmem:[#allocation9 + $0x30] sm:$0xf]
        %v1867 = vld [vmem:[#allocation9 + $0x34] sm:$0xf]
        %v1868 = vld [vmem:[#allocation9 + $0x38] sm:$0xf]
        %v1869 = vld [vmem:[#allocation9 + $0x3c] sm:$0xf]
        %v1886 = vunpack.c.l.b16 %v1854
        %v1887 = vunpack.c.l.b16 %v1855
        %v1888 = vunpack.c.l.b16 %v1856
        %v1889 = vunpack.c.l.b16 %v1857
        %v1890 = vunpack.c.l.b16 %v1858
        %v1891 = vunpack.c.l.b16 %v1859
        %v1892 = vunpack.c.l.b16 %v1860
        %v1893 = vunpack.c.l.b16 %v1861
        %v1894 = vunpack.c.l.b16 %v1862
        %v1895 = vunpack.c.l.b16 %v1863
        %v1896 = vunpack.c.l.b16 %v1864
        %v1897 = vunpack.c.l.b16 %v1865
        %v1898 = vunpack.c.l.b16 %v1866
        %v1899 = vunpack.c.l.b16 %v1867
        %v1900 = vunpack.c.l.b16 %v1868
        %v1901 = vunpack.c.l.b16 %v1869
        %v1902 = vpack.c.b16 %v1887, %v1886
        %v1903 = vpack.c.b16 %v1889, %v1888
        %v1904 = vpack.c.b16 %v1891, %v1890
        %v1905 = vpack.c.b16 %v1893, %v1892
        %v1906 = vpack.c.b16 %v1895, %v1894
        %v1907 = vpack.c.b16 %v1897, %v1896
        %v1908 = vpack.c.b16 %v1899, %v1898
        %v1909 = vpack.c.b16 %v1901, %v1900
        %1918 = vmatpush.bf16.msra.mxu0 %v1909
        %1919 = vmatpush.bf16.msra.mxu0 %v1908
        %1920 = vmatpush.bf16.msra.mxu0 %v1907
        %1921 = vmatpush.bf16.msra.mxu0 %v1906
        %1922 = vmatpush.bf16.msra.mxu0 %v1905
        %1923 = vmatpush.bf16.msra.mxu0 %v1904
        %1924 = vmatpush.bf16.msra.mxu0 %v1903
        %1925 = vmatpush.bf16.msra.mxu0 %v1902
        %1926 = vmatmul.bf16.gmra.mxu0 %v1838
        %v1927 = vpop.f32.mrf.mxu0
        %v1928 = vadd.f32 0.0, %v1927
        %v1929 = vpop.f32.mrf.mxu0
        %v1930 = vadd.f32 0.0, %v1929
        %1931 = vmatmul.bf16.gmra.mxu0 %v1839
        %v1932 = vpop.f32.mrf.mxu0
        %v1933 = vadd.f32 0.0, %v1932
        %v1934 = vpop.f32.mrf.mxu0
        %v1935 = vadd.f32 0.0, %v1934
        %1936 = vmatmul.bf16.gmra.mxu0 %v1840
        %v1937 = vpop.f32.mrf.mxu0
        %v1938 = vadd.f32 0.0, %v1937
        %v1939 = vpop.f32.mrf.mxu0
        %v1940 = vadd.f32 0.0, %v1939
        %1941 = vmatmul.bf16.gmra.mxu0 %v1841
        %v1942 = vpop.f32.mrf.mxu0
        %v1943 = vadd.f32 0.0, %v1942
        %v1944 = vpop.f32.mrf.mxu0
        %v1945 = vadd.f32 0.0, %v1944
        %1946 = vmatmul.bf16.gmra.mxu0 %v1842
        %v1947 = vpop.f32.mrf.mxu0
        %v1948 = vadd.f32 0.0, %v1947
        %v1949 = vpop.f32.mrf.mxu0
        %v1950 = vadd.f32 0.0, %v1949
        %1951 = vmatmul.bf16.gmra.mxu0 %v1843
        %v1952 = vpop.f32.mrf.mxu0
        %v1953 = vadd.f32 0.0, %v1952
        %v1954 = vpop.f32.mrf.mxu0
        %v1955 = vadd.f32 0.0, %v1954
        %1956 = vmatmul.bf16.gmra.mxu0 %v1844
        %v1957 = vpop.f32.mrf.mxu0
        %v1958 = vadd.f32 0.0, %v1957
        %v1959 = vpop.f32.mrf.mxu0
        %v1960 = vadd.f32 0.0, %v1959
        %1961 = vmatmul.bf16.gmra.mxu0 %v1845
        %v1962 = vpop.f32.mrf.mxu0
        %v1963 = vadd.f32 0.0, %v1962
        %v1964 = vpop.f32.mrf.mxu0
        %v1965 = vadd.f32 0.0, %v1964
        %1966 = vmatmul.bf16.gmra.mxu0 %v1846
        %v1967 = vpop.f32.mrf.mxu0
        %v1968 = vadd.f32 0.0, %v1967
        %v1969 = vpop.f32.mrf.mxu0
        %v1970 = vadd.f32 0.0, %v1969
        %1971 = vmatmul.bf16.gmra.mxu0 %v1847
        %v1972 = vpop.f32.mrf.mxu0
        %v1973 = vadd.f32 0.0, %v1972
        %v1974 = vpop.f32.mrf.mxu0
        %v1975 = vadd.f32 0.0, %v1974
        %1976 = vmatmul.bf16.gmra.mxu0 %v1848
        %v1977 = vpop.f32.mrf.mxu0
        %v1978 = vadd.f32 0.0, %v1977
        %v1979 = vpop.f32.mrf.mxu0
        %v1980 = vadd.f32 0.0, %v1979
        %1981 = vmatmul.bf16.gmra.mxu0 %v1849
        %v1982 = vpop.f32.mrf.mxu0
        %v1983 = vadd.f32 0.0, %v1982
        %v1984 = vpop.f32.mrf.mxu0
        %v1985 = vadd.f32 0.0, %v1984
        %1986 = vmatmul.bf16.gmra.mxu0 %v1850
        %v1987 = vpop.f32.mrf.mxu0
        %v1988 = vadd.f32 0.0, %v1987
        %v1989 = vpop.f32.mrf.mxu0
        %v1990 = vadd.f32 0.0, %v1989
        %1991 = vmatmul.bf16.gmra.mxu0 %v1851
        %v1992 = vpop.f32.mrf.mxu0
        %v1993 = vadd.f32 0.0, %v1992
        %v1994 = vpop.f32.mrf.mxu0
        %v1995 = vadd.f32 0.0, %v1994
        %1996 = vmatmul.bf16.gmra.mxu0 %v1852
        %v1997 = vpop.f32.mrf.mxu0
        %v1998 = vadd.f32 0.0, %v1997
        %v1999 = vpop.f32.mrf.mxu0
        %v2000 = vadd.f32 0.0, %v1999
        %2001 = vmatmul.bf16.gmra.mxu0 %v1853
        %v2002 = vpop.f32.mrf.mxu0
        %v2003 = vadd.f32 0.0, %v2002
        %v2004 = vpop.f32.mrf.mxu0
        %v2005 = vadd.f32 0.0, %v2004
        %2006 = vdwg.mxu0
        %v2007 = vld [vmem:[%s8] sm:$0x1]
        %v2009 = vperm.slane %v2007, 0
        %v2011 = vmul.f32 %v1928, %v2009
        %v2012 = vmul.f32 %v1930, %v2009
        %v2013 = vmul.f32 %v1933, %v2009
        %v2014 = vmul.f32 %v1935, %v2009
        %v2015 = vmul.f32 %v1938, %v2009
        %v2016 = vmul.f32 %v1940, %v2009
        %v2017 = vmul.f32 %v1943, %v2009
        %v2018 = vmul.f32 %v1945, %v2009
        %v2019 = vmul.f32 %v1948, %v2009
        %v2020 = vmul.f32 %v1950, %v2009
        %v2021 = vmul.f32 %v1953, %v2009
        %v2022 = vmul.f32 %v1955, %v2009
        %v2023 = vmul.f32 %v1958, %v2009
        %v2024 = vmul.f32 %v1960, %v2009
        %v2025 = vmul.f32 %v1963, %v2009
        %v2026 = vmul.f32 %v1965, %v2009
        %v2027 = vmul.f32 %v1968, %v2009
        %v2028 = vmul.f32 %v1970, %v2009
        %v2029 = vmul.f32 %v1973, %v2009
        %v2030 = vmul.f32 %v1975, %v2009
        %v2031 = vmul.f32 %v1978, %v2009
        %v2032 = vmul.f32 %v1980, %v2009
        %v2033 = vmul.f32 %v1983, %v2009
        %v2034 = vmul.f32 %v1985, %v2009
        %v2035 = vmul.f32 %v1988, %v2009
        %v2036 = vmul.f32 %v1990, %v2009
        %v2037 = vmul.f32 %v1993, %v2009
        %v2038 = vmul.f32 %v1995, %v2009
        %v2039 = vmul.f32 %v1998, %v2009
        %v2040 = vmul.f32 %v2000, %v2009
        %v2041 = vmul.f32 %v2003, %v2009
        %v2042 = vmul.f32 %v2005, %v2009
        %v2043 = vld [vmem:[%s9] sm:$0x1]
        %v2045 = vperm.slane %v2043, 0
        %v2047 = vadd.f32 %v2011, %v2045
        %v2048 = vadd.f32 %v2012, %v2045
        %v2049 = vadd.f32 %v2013, %v2045
        %v2050 = vadd.f32 %v2014, %v2045
        %v2051 = vadd.f32 %v2015, %v2045
        %v2052 = vadd.f32 %v2016, %v2045
        %v2053 = vadd.f32 %v2017, %v2045
        %v2054 = vadd.f32 %v2018, %v2045
        %v2055 = vadd.f32 %v2019, %v2045
        %v2056 = vadd.f32 %v2020, %v2045
        %v2057 = vadd.f32 %v2021, %v2045
        %v2058 = vadd.f32 %v2022, %v2045
        %v2059 = vadd.f32 %v2023, %v2045
        %v2060 = vadd.f32 %v2024, %v2045
        %v2061 = vadd.f32 %v2025, %v2045
        %v2062 = vadd.f32 %v2026, %v2045
        %v2063 = vadd.f32 %v2027, %v2045
        %v2064 = vadd.f32 %v2028, %v2045
        %v2065 = vadd.f32 %v2029, %v2045
        %v2066 = vadd.f32 %v2030, %v2045
        %v2067 = vadd.f32 %v2031, %v2045
        %v2068 = vadd.f32 %v2032, %v2045
        %v2069 = vadd.f32 %v2033, %v2045
        %v2070 = vadd.f32 %v2034, %v2045
        %v2071 = vadd.f32 %v2035, %v2045
        %v2072 = vadd.f32 %v2036, %v2045
        %v2073 = vadd.f32 %v2037, %v2045
        %v2074 = vadd.f32 %v2038, %v2045
        %v2075 = vadd.f32 %v2039, %v2045
        %v2076 = vadd.f32 %v2040, %v2045
        %v2077 = vadd.f32 %v2041, %v2045
        %v2078 = vadd.f32 %v2042, %v2045
        %v2079 = vmax.f32 %v2047, 0.0
        %v2080 = vmax.f32 %v2048, 0.0
        %v2081 = vmax.f32 %v2049, 0.0
        %v2082 = vmax.f32 %v2050, 0.0
        %v2083 = vmax.f32 %v2051, 0.0
        %v2084 = vmax.f32 %v2052, 0.0
        %v2085 = vmax.f32 %v2053, 0.0
        %v2086 = vmax.f32 %v2054, 0.0
        %v2087 = vmax.f32 %v2055, 0.0
        %v2088 = vmax.f32 %v2056, 0.0
        %v2089 = vmax.f32 %v2057, 0.0
        %v2090 = vmax.f32 %v2058, 0.0
        %v2091 = vmax.f32 %v2059, 0.0
        %v2092 = vmax.f32 %v2060, 0.0
        %v2093 = vmax.f32 %v2061, 0.0
        %v2094 = vmax.f32 %v2062, 0.0
        %v2095 = vmax.f32 %v2063, 0.0
        %v2096 = vmax.f32 %v2064, 0.0
        %v2097 = vmax.f32 %v2065, 0.0
        %v2098 = vmax.f32 %v2066, 0.0
        %v2099 = vmax.f32 %v2067, 0.0
        %v2100 = vmax.f32 %v2068, 0.0
        %v2101 = vmax.f32 %v2069, 0.0
        %v2102 = vmax.f32 %v2070, 0.0
        %v2103 = vmax.f32 %v2071, 0.0
        %v2104 = vmax.f32 %v2072, 0.0
        %v2105 = vmax.f32 %v2073, 0.0
        %v2106 = vmax.f32 %v2074, 0.0
        %v2107 = vmax.f32 %v2075, 0.0
        %v2108 = vmax.f32 %v2076, 0.0
        %v2109 = vmax.f32 %v2077, 0.0
        %v2110 = vmax.f32 %v2078, 0.0
        %2111 = vst [vmem:[%s429] sm:$0xff] %v2079
        %2112 = vst [vmem:[%s429 + $0x8] sm:$0xff] %v2080
        %2113 = vst [vmem:[%s429 + $0x10] sm:$0xff] %v2081
        %2114 = vst [vmem:[%s429 + $0x18] sm:$0xff] %v2082
        %2115 = vst [vmem:[%s429 + $0x20] sm:$0xff] %v2083
        %2116 = vst [vmem:[%s429 + $0x28] sm:$0xff] %v2084
        %2117 = vst [vmem:[%s429 + $0x30] sm:$0xff] %v2085
        %2118 = vst [vmem:[%s429 + $0x38] sm:$0xff] %v2086
        %2119 = vst [vmem:[%s429 + $0x40] sm:$0xff] %v2087
        %2120 = vst [vmem:[%s429 + $0x48] sm:$0xff] %v2088
        %2121 = vst [vmem:[%s429 + $0x50] sm:$0xff] %v2089
        %2122 = vst [vmem:[%s429 + $0x58] sm:$0xff] %v2090
        %2123 = vst [vmem:[%s429 + $0x60] sm:$0xff] %v2091
        %2124 = vst [vmem:[%s429 + $0x68] sm:$0xff] %v2092
        %2125 = vst [vmem:[%s429 + $0x70] sm:$0xff] %v2093
        %2126 = vst [vmem:[%s429 + $0x78] sm:$0xff] %v2094
        %2127 = vst [vmem:[%s429 + $0x80] sm:$0xff] %v2095
        %2128 = vst [vmem:[%s429 + $0x88] sm:$0xff] %v2096
        %2129 = vst [vmem:[%s429 + $0x90] sm:$0xff] %v2097
        %2130 = vst [vmem:[%s429 + $0x98] sm:$0xff] %v2098
        %2131 = vst [vmem:[%s429 + $0xa0] sm:$0xff] %v2099
        %2132 = vst [vmem:[%s429 + $0xa8] sm:$0xff] %v2100
        %2133 = vst [vmem:[%s429 + $0xb0] sm:$0xff] %v2101
        %2134 = vst [vmem:[%s429 + $0xb8] sm:$0xff] %v2102
        %2135 = vst [vmem:[%s429 + $0xc0] sm:$0xff] %v2103
        %2136 = vst [vmem:[%s429 + $0xc8] sm:$0xff] %v2104
        %2137 = vst [vmem:[%s429 + $0xd0] sm:$0xff] %v2105
        %2138 = vst [vmem:[%s429 + $0xd8] sm:$0xff] %v2106
        %2139 = vst [vmem:[%s429 + $0xe0] sm:$0xff] %v2107
        %2140 = vst [vmem:[%s429 + $0xe8] sm:$0xff] %v2108
        %2141 = vst [vmem:[%s429 + $0xf0] sm:$0xff] %v2109
        %2142 = vst [vmem:[%s429 + $0xf8] sm:$0xff] %v2110
        %s2143 = sand.u32 %s252, 1
        %s2144 = scalar_lea.sflag [#allocation5], %s2143
        %s2145 = sand.u32 %s252, 1
        %s2146 = smul.addr %s2145, 256
        %s2147 = scalar_lea.vmem [#allocation11], %s2146
        // Predicated region
        $region77: #{tpu_custom_call.1} parent=59 // pred_check
          %p2148 = pneg %p262
        $region78: #{tpu_custom_call.1} parent=59 // pred_check_branch
          %2150 = sbr.rel (%p2148) target = $region80
        $region79: #{tpu_custom_call.1} parent=59 // pred_region
          %2152 = vsyncadd %s2144, 0
          %s2153 = smul.addr %s29, 32
          %s2154 = smul.addr %s2153, 8
          %s2155 = scalar_lea.hbm %s10, %s2154
          %s2156 = sshll.u32 %s2147, 4
          %s2157 = int_to_ptr.vmem [resolvable:$true] %s2156
          %s2158 = sshll.u32 %s2155, 4
          %s2159 = int_to_ptr.hbm [resolvable:$true] %s2158
          %2164 = dma.vmem_to_hbm [thread:$0]  %s2157, 4096, %s2159, %s2144, 128, 128, 8
        $region80: #{tpu_custom_call.1} parent=59 // pred_fallthru
          _
      $region60: #{tpu_custom_call.1} parent=5 // pred_fallthru
        _
      %p2165 = scmp.le.s32.totalorder 2, %s24
      // Predicated region
      $region81: #{tpu_custom_call.1} parent=5 // pred_check
        %p2166 = pneg %p2165
      $region82: #{tpu_custom_call.1} parent=5 // pred_check_branch
        %2168 = sbr.rel (%p2166) target = $region84
      $region83: #{tpu_custom_call.1} parent=5 // pred_region
        %s2169 = ssub.s32 %s24, 2
        // Predicated region
        $region85: #{tpu_custom_call.1} parent=83 // pred_check
          %p2170 = pneg %p268
        $region86: #{tpu_custom_call.1} parent=83 // pred_check_branch
          %2172 = sbr.rel (%p2170) target = $region88
        $region87: #{tpu_custom_call.1} parent=83 // pred_region
          %s2173 = sand.u32 %s253, 1
          %s2174 = scalar_lea.sflag [#allocation5], %s2173
          %s2175 = sand.u32 %s253, 1
          %s2176 = smul.addr %s2175, 256
          %s2177 = scalar_lea.vmem [#allocation11], %s2176
          %2179 = dma.done %s2174, 4096
        $region88: #{tpu_custom_call.1} parent=83 // pred_fallthru
          _
      $region84: #{tpu_custom_call.1} parent=5 // pred_fallthru
        _
    $region6: #{tpu_custom_call.1} parent=1 // loop_footer
      %s28 = sadd.s32 1, %s24
    $region7: #{tpu_custom_call.1} parent=1 // loop_footer_branch
      %23 = sbr.rel target = $region3
    $region8: #{tpu_custom_call.1} parent=1 // loop_exit
      _
    %2180 = vsyncpa [#allocation4], 1
    %s2181 = scalar_lea.sflag [#allocation4], 1
    %2182 = vsyncpa %s2181, 1
    %2183 = vsyncpa [#allocation7], 1
    %2184 = vsyncpa [#allocation10], 1
    %2185 = vsyncpa [#allocation5], 1
    %s2186 = scalar_lea.sflag [#allocation5], 1
    %2187 = vsyncpa %s2186, 1

</llo_original>
